<compile_context>
chip_gen: v7x
topology: tpu7x:2x2x1
jax: 0.10.0
libtpu: 0.0.40
codegen_flags: <defaults>
</compile_context>

<pallas_src>
import math

import numpy as np
import jax
import jax.numpy as jnp
from jax.experimental import pallas as pl
from jax.experimental.pallas import tpu as pltpu

NEG_SLOPE = 0.01   # nn.LeakyReLU default negative_slope
BN_EPS = 1e-5      # nn.BatchNorm1d default eps


# ----------------------------------------------------------------------------
# One-time parameter preparation (BN folding + weight relayout)
# ----------------------------------------------------------------------------
def _fold_bn(w, b, bn):
    """Fold eval-mode BatchNorm into the conv weight/bias.

    Returns w_eff with layout (K, F, Cin) (one (F, Cin) matmul per tap) and
    b_eff with shape (F, 1).
    """
    gamma, beta, mean, var = bn
    s = gamma / jnp.sqrt(var + BN_EPS)                         # (F,)
    w_eff = jnp.transpose(w * s[:, None, None], (2, 0, 1))     # (K, F, Cin)
    b_eff = ((b - mean) * s + beta)[:, None]                   # (F, 1)
    return w_eff, b_eff


def prepare_params(params, features):
    """Fold BN + relayout all conv weights once (off the per-forward critical path)."""
    wu, bu = _fold_bn(*params["up_conv"], params["up_bn"])              # (scale, F, Cin)
    wc, bc = _fold_bn(*params["contract_conv"], params["contract_bn"])  # (K, F, 2F)
    w1, b1 = _fold_bn(*params["b_conv1"], params["b_bn1"])              # (K, F, F)
    w2, b2 = _fold_bn(*params["b_conv2"], params["b_bn2"])              # (K, F, F)
    # Split the contract weight so the channel concat never has to be materialised:
    # the first F input channels act on x1 (upconv output), the last F on the residual.
    wc1, wc2 = wc[:, :, :features], wc[:, :, features:]
    return dict(wu=wu, bu=bu, wc1=wc1, wc2=wc2, bc=bc, w1=w1, b1=b1, w2=w2, b2=b2)


# ----------------------------------------------------------------------------
# Parameter init (deterministic, PyTorch-like shapes)
# ----------------------------------------------------------------------------
def init_params(key, in_channels, features, kernel_size, scale):
    def conv_p(k, cout, cin, ksz):
        k1, k2 = jax.random.split(k)
        bound = 1.0 / math.sqrt(cin * ksz)
        w = jax.random.uniform(k1, (cout, cin, ksz), jnp.float32, -bound, bound)
        b = jax.random.uniform(k2, (cout,), jnp.float32, -bound, bound)
        return w, b

    def bn_p(k, c):
        k1, k2, k3, k4 = jax.random.split(k, 4)
        gamma = 1.0 + 0.1 * jax.random.normal(k1, (c,), jnp.float32)
        beta = 0.1 * jax.random.normal(k2, (c,), jnp.float32)
        mean = 0.1 * jax.random.normal(k3, (c,), jnp.float32)
        var = jax.random.uniform(k4, (c,), jnp.float32, 0.5, 1.5)
        return gamma, beta, mean, var

    ks = jax.random.split(key, 8)
    return {
        "up_conv": conv_p(ks[0], features, in_channels, scale),
        "up_bn": bn_p(ks[1], features),
        "contract_conv": conv_p(ks[2], features, 2 * features, kernel_size),
        "contract_bn": bn_p(ks[3], features),
        "b_conv1": conv_p(ks[4], features, features, kernel_size),
        "b_bn1": bn_p(ks[5], features),
        "b_conv2": conv_p(ks[6], features, features, kernel_size),
        "b_bn2": bn_p(ks[7], features),
    }


# ----------------------------------------------------------------------------
# DecoderBlock forward: a single fused Pallas kernel, one grid step per batch element
# ----------------------------------------------------------------------------
def decoder_block_forward(x, res, prep, *, scale, kernel_size):
    N, Cin, Lx = x.shape
    _, F, Lres = res.shape
    K = kernel_size

    # Static length bookkeeping (identical to the PyTorch module).
    L_up = scale * (Lx + 1) - 1          # nearest-exact interpolate target size
    L1 = L_up - scale + 1                # upconv output length  (== scale * Lx)
    Lc = min(L1, Lres)                   # centre-crop common length
    d = abs(L1 - Lres)
    lcrop = d // 2                       # floor, matches DecoderBlock.centre_crop
    L2 = Lc - K + 1                      # contract output length
    L3 = L2 - K + 1                      # BasicBlock conv1 output length
    L4 = L3 - K + 1                      # BasicBlock conv2 / final output length
    skip_start = (L2 - L4) // 2          # torch.narrow start for the residual

    # nearest-exact upsample as a static 0/1 selection matrix; the gather becomes a
    # tiny matmul fused inside the kernel (no XLA gather between kernels).
    src = np.minimum(
        np.floor((np.arange(L_up) + 0.5) * (Lx / L_up)).astype(np.int32), Lx - 1)
    sel = np.zeros((Lx, L_up), np.float32)
    sel[src, np.arange(L_up)] = 1.0
    sel = jnp.asarray(sel)

    def lrelu(y):
        return jnp.where(y >= 0, y, NEG_SLOPE * y)

    def conv(v, w_ref, lout, taps):
        # valid Conv1d as `taps` MXU matmuls accumulated in f32 (weights are BN-folded)
        acc = jnp.dot(w_ref[0], v[:, 0:lout], preferred_element_type=jnp.float32)
        for k in range(1, taps):
            acc = acc + jnp.dot(w_ref[k], v[:, k:k + lout],
                                preferred_element_type=jnp.float32)
        return acc

    def kernel(x_ref, res_ref, sel_ref, wu_ref, bu_ref, wc1_ref, wc2_ref, bc_ref,
               w1_ref, b1_ref, w2_ref, b2_ref, o_ref):
        # --- UpConvBlock: nearest-exact upsample + Conv1d(K=scale) + BN + LeakyReLU ---
        x_up = jnp.dot(x_ref[0], sel_ref[...],
                       preferred_element_type=jnp.float32)                   # (Cin, L_up)
        x1 = lrelu(conv(x_up, wu_ref, L1, scale) + bu_ref[...])              # (F, L1)

        # --- centre_crop (static slices, resolved at trace time) ---
        r = res_ref[0]                                                       # (F, Lres)
        if L1 > Lres:
            x1 = x1[:, lcrop:lcrop + Lc]
        elif Lres > L1:
            r = r[:, lcrop:lcrop + Lc]

        # --- contract: Conv1d(2F->F) + BN (no act); concat removed via weight split ---
        c = conv(x1, wc1_ref, L2, K) + conv(r, wc2_ref, L2, K) + bc_ref[...]  # (F, L2)

        # --- BasicBlock: conv1+bn1+act, conv2+bn2, centred residual, act ---
        h = lrelu(conv(c, w1_ref, L3, K) + b1_ref[...])                      # (F, L3)
        out = conv(h, w2_ref, L4, K) + b2_ref[...]                           # (F, L4)
        out = lrelu(out + c[:, skip_start:skip_start + L4])
        o_ref[0] = out.astype(o_ref.dtype)

    def batch_spec(shape):
        return pl.BlockSpec((1,) + shape, lambda n: (n, 0, 0))

    def shared_spec(shape):
        return pl.BlockSpec(shape, lambda n: (0,) * len(shape))

    return pl.pallas_call(
        kernel,
        grid=(N,),
        in_specs=[
            batch_spec((Cin, Lx)),                               # x
            batch_spec((F, Lres)),                               # res
            shared_spec((Lx, L_up)),                             # upsample selection
            shared_spec((scale, F, Cin)), shared_spec((F, 1)),   # upconv w, b
            shared_spec((K, F, F)), shared_spec((K, F, F)), shared_spec((F, 1)),  # contract
            shared_spec((K, F, F)), shared_spec((F, 1)),         # block conv1 w, b
            shared_spec((K, F, F)), shared_spec((F, 1)),         # block conv2 w, b
        ],
        out_specs=batch_spec((F, L4)),
        out_shape=jax.ShapeDtypeStruct((N, F, L4), jnp.float32),
        compiler_params=pltpu.CompilerParams(dimension_semantics=("parallel",)),
    )(x, res, sel, prep["wu"], prep["bu"], prep["wc1"], prep["wc2"], prep["bc"],
      prep["w1"], prep["b1"], prep["w2"], prep["b2"])


if __name__ == "__main__":
    in_channels, features, scale, kernel_size = 4, 8, 2, 3
    N, Lx, Lres = 2, 16, 34

    key = jax.random.PRNGKey(0)
    kx, kr, kp = jax.random.split(key, 3)
    x = jax.random.normal(kx, (N, in_channels, Lx), jnp.float32)
    res = jax.random.normal(kr, (N, features, Lres), jnp.float32)
    params = init_params(kp, in_channels, features, kernel_size, scale)
    prep = prepare_params(params, features)   # BN folding hoisted off the forward path

    out = decoder_block_forward(x, res, prep, scale=scale, kernel_size=kernel_size)
    jax.block_until_ready(out)

    expected_len = min(scale * Lx, Lres) - 3 * (kernel_size - 1)
    assert out.shape == (N, features, expected_len), out.shape
    assert bool(jnp.all(jnp.isfinite(out)))
    print("KERNEL_OK")
</pallas_src>

<mosaic_0001>
module attributes {stable_mosaic.version = 11 : i64} {
  func.func @kernel(%arg0: i32, %arg1: memref<1x4x16xf32, #tpu.memory_space<vmem>>, %arg2: memref<1x8x34xf32, #tpu.memory_space<vmem>>, %arg3: memref<16x33xf32, #tpu.memory_space<vmem>>, %arg4: memref<2x8x4xf32, #tpu.memory_space<vmem>>, %arg5: memref<8x1xf32, #tpu.memory_space<vmem>>, %arg6: memref<3x8x8xf32, #tpu.memory_space<vmem>>, %arg7: memref<3x8x8xf32, #tpu.memory_space<vmem>>, %arg8: memref<8x1xf32, #tpu.memory_space<vmem>>, %arg9: memref<3x8x8xf32, #tpu.memory_space<vmem>>, %arg10: memref<8x1xf32, #tpu.memory_space<vmem>>, %arg11: memref<3x8x8xf32, #tpu.memory_space<vmem>>, %arg12: memref<8x1xf32, #tpu.memory_space<vmem>>, %arg13: memref<1x8x26xf32, #tpu.memory_space<vmem>>) attributes {dimension_semantics = [#tpu.dimension_semantics<parallel>], iteration_bounds = array<i64: 2>, scalar_prefetch = 0 : i64, scratch_operands = 0 : i64, tpu.core_type = #tpu.core_type<tc>, window_params = [{transform_indices = @transform_0, window_bounds = array<i64: 1, 4, 16>}, {transform_indices = @transform_1, window_bounds = array<i64: 1, 8, 34>}, {pipeline_mode = #tpu.pipeline_mode<synchronous>, transform_indices = @transform_2, window_bounds = array<i64: 16, 33>}, {pipeline_mode = #tpu.pipeline_mode<synchronous>, transform_indices = @transform_3, window_bounds = array<i64: 2, 8, 4>}, {pipeline_mode = #tpu.pipeline_mode<synchronous>, transform_indices = @transform_4, window_bounds = array<i64: 8, 1>}, {pipeline_mode = #tpu.pipeline_mode<synchronous>, transform_indices = @transform_5, window_bounds = array<i64: 3, 8, 8>}, {pipeline_mode = #tpu.pipeline_mode<synchronous>, transform_indices = @transform_6, window_bounds = array<i64: 3, 8, 8>}, {pipeline_mode = #tpu.pipeline_mode<synchronous>, transform_indices = @transform_7, window_bounds = array<i64: 8, 1>}, {pipeline_mode = #tpu.pipeline_mode<synchronous>, transform_indices = @transform_8, window_bounds = array<i64: 3, 8, 8>}, {pipeline_mode = #tpu.pipeline_mode<synchronous>, transform_indices = @transform_9, window_bounds = array<i64: 8, 1>}, {pipeline_mode = #tpu.pipeline_mode<synchronous>, transform_indices = @transform_10, window_bounds = array<i64: 3, 8, 8>}, {pipeline_mode = #tpu.pipeline_mode<synchronous>, transform_indices = @transform_11, window_bounds = array<i64: 8, 1>}, {transform_indices = @transform_12, window_bounds = array<i64: 1, 8, 26>}]} {
    %c0 = arith.constant 0 : index
    %c0_0 = arith.constant 0 : index
    %c0_1 = arith.constant 0 : index
    %0 = vector.load %arg1[%c0, %c0_0, %c0_1] : memref<1x4x16xf32, #tpu.memory_space<vmem>>, vector<1x4x16xf32>
    %1 = vector.shape_cast %0 : vector<1x4x16xf32> to vector<4x16xf32>
    %c0_2 = arith.constant 0 : index
    %c0_3 = arith.constant 0 : index
    %2 = vector.load %arg3[%c0_2, %c0_3] : memref<16x33xf32, #tpu.memory_space<vmem>>, vector<16x33xf32>
    %cst = arith.constant dense<0.000000e+00> : vector<4x33xf32>
    %3 = tpu.matmul %1, %2, %cst {dimension_numbers = #tpu.dot_dimension_numbers<[1], [0], [0], [1], [0, 0, 1, 1], [], []>} : vector<4x16xf32>, vector<16x33xf32>, vector<4x33xf32> -> vector<4x33xf32>
    %c0_4 = arith.constant 0 : index
    %c0_5 = arith.constant 0 : index
    %c0_6 = arith.constant 0 : index
    %4 = vector.load %arg4[%c0_4, %c0_5, %c0_6] : memref<2x8x4xf32, #tpu.memory_space<vmem>>, vector<1x8x4xf32>
    %5 = vector.shape_cast %4 : vector<1x8x4xf32> to vector<8x4xf32>
    %6 = vector.extract_strided_slice %3 {offsets = [0, 0], sizes = [4, 32], strides = [1, 1]} : vector<4x33xf32> to vector<4x32xf32>
    %cst_7 = arith.constant dense<0.000000e+00> : vector<8x32xf32>
    %7 = tpu.matmul %5, %6, %cst_7 {dimension_numbers = #tpu.dot_dimension_numbers<[1], [0], [0], [1], [0, 0, 1, 1], [], []>} : vector<8x4xf32>, vector<4x32xf32>, vector<8x32xf32> -> vector<8x32xf32>
    %c1 = arith.constant 1 : index
    %c0_8 = arith.constant 0 : index
    %c0_9 = arith.constant 0 : index
    %8 = vector.load %arg4[%c1, %c0_8, %c0_9] : memref<2x8x4xf32, #tpu.memory_space<vmem>>, vector<1x8x4xf32>
    %9 = vector.shape_cast %8 : vector<1x8x4xf32> to vector<8x4xf32>
    %10 = vector.extract_strided_slice %3 {offsets = [0, 1], sizes = [4, 32], strides = [1, 1]} : vector<4x33xf32> to vector<4x32xf32>
    %cst_10 = arith.constant dense<0.000000e+00> : vector<8x32xf32>
    %11 = tpu.matmul %9, %10, %cst_10 {dimension_numbers = #tpu.dot_dimension_numbers<[1], [0], [0], [1], [0, 0, 1, 1], [], []>} : vector<8x4xf32>, vector<4x32xf32>, vector<8x32xf32> -> vector<8x32xf32>
    %12 = arith.addf %7, %11 : vector<8x32xf32>
    %c0_11 = arith.constant 0 : index
    %c0_12 = arith.constant 0 : index
    %13 = vector.load %arg5[%c0_11, %c0_12] : memref<8x1xf32, #tpu.memory_space<vmem>>, vector<8x1xf32>
    %14 = vector.broadcast %13 : vector<8x1xf32> to vector<8x32xf32>
    %15 = arith.addf %12, %14 : vector<8x32xf32>
    %cst_13 = arith.constant 0.000000e+00 : f32
    %16 = vector.broadcast %cst_13 : f32 to vector<8x32xf32>
    %17 = arith.cmpf oge, %15, %16 : vector<8x32xf32>
    %cst_14 = arith.constant 0.00999999977 : f32
    %18 = vector.broadcast %cst_14 : f32 to vector<8x32xf32>
    %19 = arith.mulf %18, %15 : vector<8x32xf32>
    %20 = arith.select %17, %15, %19 : vector<8x32xi1>, vector<8x32xf32>
    %c0_15 = arith.constant 0 : index
    %c0_16 = arith.constant 0 : index
    %c0_17 = arith.constant 0 : index
    %21 = vector.load %arg2[%c0_15, %c0_16, %c0_17] : memref<1x8x34xf32, #tpu.memory_space<vmem>>, vector<1x8x34xf32>
    %22 = vector.shape_cast %21 : vector<1x8x34xf32> to vector<8x34xf32>
    %23 = vector.extract_strided_slice %22 {offsets = [0, 1], sizes = [8, 32], strides = [1, 1]} : vector<8x34xf32> to vector<8x32xf32>
    %c0_18 = arith.constant 0 : index
    %c0_19 = arith.constant 0 : index
    %c0_20 = arith.constant 0 : index
    %24 = vector.load %arg6[%c0_18, %c0_19, %c0_20] : memref<3x8x8xf32, #tpu.memory_space<vmem>>, vector<1x8x8xf32>
    %25 = vector.shape_cast %24 : vector<1x8x8xf32> to vector<8x8xf32>
    %26 = vector.extract_strided_slice %20 {offsets = [0, 0], sizes = [8, 30], strides = [1, 1]} : vector<8x32xf32> to vector<8x30xf32>
    %cst_21 = arith.constant dense<0.000000e+00> : vector<8x30xf32>
    %27 = tpu.matmul %25, %26, %cst_21 {dimension_numbers = #tpu.dot_dimension_numbers<[1], [0], [0], [1], [0, 0, 1, 1], [], []>} : vector<8x8xf32>, vector<8x30xf32>, vector<8x30xf32> -> vector<8x30xf32>
    %c1_22 = arith.constant 1 : index
    %c0_23 = arith.constant 0 : index
    %c0_24 = arith.constant 0 : index
    %28 = vector.load %arg6[%c1_22, %c0_23, %c0_24] : memref<3x8x8xf32, #tpu.memory_space<vmem>>, vector<1x8x8xf32>
    %29 = vector.shape_cast %28 : vector<1x8x8xf32> to vector<8x8xf32>
    %30 = vector.extract_strided_slice %20 {offsets = [0, 1], sizes = [8, 30], strides = [1, 1]} : vector<8x32xf32> to vector<8x30xf32>
    %cst_25 = arith.constant dense<0.000000e+00> : vector<8x30xf32>
    %31 = tpu.matmul %29, %30, %cst_25 {dimension_numbers = #tpu.dot_dimension_numbers<[1], [0], [0], [1], [0, 0, 1, 1], [], []>} : vector<8x8xf32>, vector<8x30xf32>, vector<8x30xf32> -> vector<8x30xf32>
    %32 = arith.addf %27, %31 : vector<8x30xf32>
    %c2 = arith.constant 2 : index
    %c0_26 = arith.constant 0 : index
    %c0_27 = arith.constant 0 : index
    %33 = vector.load %arg6[%c2, %c0_26, %c0_27] : memref<3x8x8xf32, #tpu.memory_space<vmem>>, vector<1x8x8xf32>
    %34 = vector.shape_cast %33 : vector<1x8x8xf32> to vector<8x8xf32>
    %35 = vector.extract_strided_slice %20 {offsets = [0, 2], sizes = [8, 30], strides = [1, 1]} : vector<8x32xf32> to vector<8x30xf32>
    %cst_28 = arith.constant dense<0.000000e+00> : vector<8x30xf32>
    %36 = tpu.matmul %34, %35, %cst_28 {dimension_numbers = #tpu.dot_dimension_numbers<[1], [0], [0], [1], [0, 0, 1, 1], [], []>} : vector<8x8xf32>, vector<8x30xf32>, vector<8x30xf32> -> vector<8x30xf32>
    %37 = arith.addf %32, %36 : vector<8x30xf32>
    %c0_29 = arith.constant 0 : index
    %c0_30 = arith.constant 0 : index
    %c0_31 = arith.constant 0 : index
    %38 = vector.load %arg7[%c0_29, %c0_30, %c0_31] : memref<3x8x8xf32, #tpu.memory_space<vmem>>, vector<1x8x8xf32>
    %39 = vector.shape_cast %38 : vector<1x8x8xf32> to vector<8x8xf32>
    %40 = vector.extract_strided_slice %23 {offsets = [0, 0], sizes = [8, 30], strides = [1, 1]} : vector<8x32xf32> to vector<8x30xf32>
    %cst_32 = arith.constant dense<0.000000e+00> : vector<8x30xf32>
    %41 = tpu.matmul %39, %40, %cst_32 {dimension_numbers = #tpu.dot_dimension_numbers<[1], [0], [0], [1], [0, 0, 1, 1], [], []>} : vector<8x8xf32>, vector<8x30xf32>, vector<8x30xf32> -> vector<8x30xf32>
    %c1_33 = arith.constant 1 : index
    %c0_34 = arith.constant 0 : index
    %c0_35 = arith.constant 0 : index
    %42 = vector.load %arg7[%c1_33, %c0_34, %c0_35] : memref<3x8x8xf32, #tpu.memory_space<vmem>>, vector<1x8x8xf32>
    %43 = vector.shape_cast %42 : vector<1x8x8xf32> to vector<8x8xf32>
    %44 = vector.extract_strided_slice %23 {offsets = [0, 1], sizes = [8, 30], strides = [1, 1]} : vector<8x32xf32> to vector<8x30xf32>
    %cst_36 = arith.constant dense<0.000000e+00> : vector<8x30xf32>
    %45 = tpu.matmul %43, %44, %cst_36 {dimension_numbers = #tpu.dot_dimension_numbers<[1], [0], [0], [1], [0, 0, 1, 1], [], []>} : vector<8x8xf32>, vector<8x30xf32>, vector<8x30xf32> -> vector<8x30xf32>
    %46 = arith.addf %41, %45 : vector<8x30xf32>
    %c2_37 = arith.constant 2 : index
    %c0_38 = arith.constant 0 : index
    %c0_39 = arith.constant 0 : index
    %47 = vector.load %arg7[%c2_37, %c0_38, %c0_39] : memref<3x8x8xf32, #tpu.memory_space<vmem>>, vector<1x8x8xf32>
    %48 = vector.shape_cast %47 : vector<1x8x8xf32> to vector<8x8xf32>
    %49 = vector.extract_strided_slice %23 {offsets = [0, 2], sizes = [8, 30], strides = [1, 1]} : vector<8x32xf32> to vector<8x30xf32>
    %cst_40 = arith.constant dense<0.000000e+00> : vector<8x30xf32>
    %50 = tpu.matmul %48, %49, %cst_40 {dimension_numbers = #tpu.dot_dimension_numbers<[1], [0], [0], [1], [0, 0, 1, 1], [], []>} : vector<8x8xf32>, vector<8x30xf32>, vector<8x30xf32> -> vector<8x30xf32>
    %51 = arith.addf %46, %50 : vector<8x30xf32>
    %52 = arith.addf %37, %51 : vector<8x30xf32>
    %c0_41 = arith.constant 0 : index
    %c0_42 = arith.constant 0 : index
    %53 = vector.load %arg8[%c0_41, %c0_42] : memref<8x1xf32, #tpu.memory_space<vmem>>, vector<8x1xf32>
    %54 = vector.broadcast %53 : vector<8x1xf32> to vector<8x30xf32>
    %55 = arith.addf %52, %54 : vector<8x30xf32>
    %c0_43 = arith.constant 0 : index
    %c0_44 = arith.constant 0 : index
    %c0_45 = arith.constant 0 : index
    %56 = vector.load %arg9[%c0_43, %c0_44, %c0_45] : memref<3x8x8xf32, #tpu.memory_space<vmem>>, vector<1x8x8xf32>
    %57 = vector.shape_cast %56 : vector<1x8x8xf32> to vector<8x8xf32>
    %58 = vector.extract_strided_slice %55 {offsets = [0, 0], sizes = [8, 28], strides = [1, 1]} : vector<8x30xf32> to vector<8x28xf32>
    %cst_46 = arith.constant dense<0.000000e+00> : vector<8x28xf32>
    %59 = tpu.matmul %57, %58, %cst_46 {dimension_numbers = #tpu.dot_dimension_numbers<[1], [0], [0], [1], [0, 0, 1, 1], [], []>} : vector<8x8xf32>, vector<8x28xf32>, vector<8x28xf32> -> vector<8x28xf32>
    %c1_47 = arith.constant 1 : index
    %c0_48 = arith.constant 0 : index
    %c0_49 = arith.constant 0 : index
    %60 = vector.load %arg9[%c1_47, %c0_48, %c0_49] : memref<3x8x8xf32, #tpu.memory_space<vmem>>, vector<1x8x8xf32>
    %61 = vector.shape_cast %60 : vector<1x8x8xf32> to vector<8x8xf32>
    %62 = vector.extract_strided_slice %55 {offsets = [0, 1], sizes = [8, 28], strides = [1, 1]} : vector<8x30xf32> to vector<8x28xf32>
    %cst_50 = arith.constant dense<0.000000e+00> : vector<8x28xf32>
    %63 = tpu.matmul %61, %62, %cst_50 {dimension_numbers = #tpu.dot_dimension_numbers<[1], [0], [0], [1], [0, 0, 1, 1], [], []>} : vector<8x8xf32>, vector<8x28xf32>, vector<8x28xf32> -> vector<8x28xf32>
    %64 = arith.addf %59, %63 : vector<8x28xf32>
    %c2_51 = arith.constant 2 : index
    %c0_52 = arith.constant 0 : index
    %c0_53 = arith.constant 0 : index
    %65 = vector.load %arg9[%c2_51, %c0_52, %c0_53] : memref<3x8x8xf32, #tpu.memory_space<vmem>>, vector<1x8x8xf32>
    %66 = vector.shape_cast %65 : vector<1x8x8xf32> to vector<8x8xf32>
    %67 = vector.extract_strided_slice %55 {offsets = [0, 2], sizes = [8, 28], strides = [1, 1]} : vector<8x30xf32> to vector<8x28xf32>
    %cst_54 = arith.constant dense<0.000000e+00> : vector<8x28xf32>
    %68 = tpu.matmul %66, %67, %cst_54 {dimension_numbers = #tpu.dot_dimension_numbers<[1], [0], [0], [1], [0, 0, 1, 1], [], []>} : vector<8x8xf32>, vector<8x28xf32>, vector<8x28xf32> -> vector<8x28xf32>
    %69 = arith.addf %64, %68 : vector<8x28xf32>
    %c0_55 = arith.constant 0 : index
    %c0_56 = arith.constant 0 : index
    %70 = vector.load %arg10[%c0_55, %c0_56] : memref<8x1xf32, #tpu.memory_space<vmem>>, vector<8x1xf32>
    %71 = vector.broadcast %70 : vector<8x1xf32> to vector<8x28xf32>
    %72 = arith.addf %69, %71 : vector<8x28xf32>
    %cst_57 = arith.constant 0.000000e+00 : f32
    %73 = vector.broadcast %cst_57 : f32 to vector<8x28xf32>
    %74 = arith.cmpf oge, %72, %73 : vector<8x28xf32>
    %cst_58 = arith.constant 0.00999999977 : f32
    %75 = vector.broadcast %cst_58 : f32 to vector<8x28xf32>
    %76 = arith.mulf %75, %72 : vector<8x28xf32>
    %77 = arith.select %74, %72, %76 : vector<8x28xi1>, vector<8x28xf32>
    %c0_59 = arith.constant 0 : index
    %c0_60 = arith.constant 0 : index
    %c0_61 = arith.constant 0 : index
    %78 = vector.load %arg11[%c0_59, %c0_60, %c0_61] : memref<3x8x8xf32, #tpu.memory_space<vmem>>, vector<1x8x8xf32>
    %79 = vector.shape_cast %78 : vector<1x8x8xf32> to vector<8x8xf32>
    %80 = vector.extract_strided_slice %77 {offsets = [0, 0], sizes = [8, 26], strides = [1, 1]} : vector<8x28xf32> to vector<8x26xf32>
    %cst_62 = arith.constant dense<0.000000e+00> : vector<8x26xf32>
    %81 = tpu.matmul %79, %80, %cst_62 {dimension_numbers = #tpu.dot_dimension_numbers<[1], [0], [0], [1], [0, 0, 1, 1], [], []>} : vector<8x8xf32>, vector<8x26xf32>, vector<8x26xf32> -> vector<8x26xf32>
    %c1_63 = arith.constant 1 : index
    %c0_64 = arith.constant 0 : index
    %c0_65 = arith.constant 0 : index
    %82 = vector.load %arg11[%c1_63, %c0_64, %c0_65] : memref<3x8x8xf32, #tpu.memory_space<vmem>>, vector<1x8x8xf32>
    %83 = vector.shape_cast %82 : vector<1x8x8xf32> to vector<8x8xf32>
    %84 = vector.extract_strided_slice %77 {offsets = [0, 1], sizes = [8, 26], strides = [1, 1]} : vector<8x28xf32> to vector<8x26xf32>
    %cst_66 = arith.constant dense<0.000000e+00> : vector<8x26xf32>
    %85 = tpu.matmul %83, %84, %cst_66 {dimension_numbers = #tpu.dot_dimension_numbers<[1], [0], [0], [1], [0, 0, 1, 1], [], []>} : vector<8x8xf32>, vector<8x26xf32>, vector<8x26xf32> -> vector<8x26xf32>
    %86 = arith.addf %81, %85 : vector<8x26xf32>
    %c2_67 = arith.constant 2 : index
    %c0_68 = arith.constant 0 : index
    %c0_69 = arith.constant 0 : index
    %87 = vector.load %arg11[%c2_67, %c0_68, %c0_69] : memref<3x8x8xf32, #tpu.memory_space<vmem>>, vector<1x8x8xf32>
    %88 = vector.shape_cast %87 : vector<1x8x8xf32> to vector<8x8xf32>
    %89 = vector.extract_strided_slice %77 {offsets = [0, 2], sizes = [8, 26], strides = [1, 1]} : vector<8x28xf32> to vector<8x26xf32>
    %cst_70 = arith.constant dense<0.000000e+00> : vector<8x26xf32>
    %90 = tpu.matmul %88, %89, %cst_70 {dimension_numbers = #tpu.dot_dimension_numbers<[1], [0], [0], [1], [0, 0, 1, 1], [], []>} : vector<8x8xf32>, vector<8x26xf32>, vector<8x26xf32> -> vector<8x26xf32>
    %91 = arith.addf %86, %90 : vector<8x26xf32>
    %c0_71 = arith.constant 0 : index
    %c0_72 = arith.constant 0 : index
    %92 = vector.load %arg12[%c0_71, %c0_72] : memref<8x1xf32, #tpu.memory_space<vmem>>, vector<8x1xf32>
    %93 = vector.broadcast %92 : vector<8x1xf32> to vector<8x26xf32>
    %94 = arith.addf %91, %93 : vector<8x26xf32>
    %95 = vector.extract_strided_slice %55 {offsets = [0, 2], sizes = [8, 26], strides = [1, 1]} : vector<8x30xf32> to vector<8x26xf32>
    %96 = arith.addf %94, %95 : vector<8x26xf32>
    %cst_73 = arith.constant 0.000000e+00 : f32
    %97 = vector.broadcast %cst_73 : f32 to vector<8x26xf32>
    %98 = arith.cmpf oge, %96, %97 : vector<8x26xf32>
    %cst_74 = arith.constant 0.00999999977 : f32
    %99 = vector.broadcast %cst_74 : f32 to vector<8x26xf32>
    %100 = arith.mulf %99, %96 : vector<8x26xf32>
    %101 = arith.select %98, %96, %100 : vector<8x26xi1>, vector<8x26xf32>
    %c0_75 = arith.constant 0 : index
    %c0_76 = arith.constant 0 : index
    %c0_77 = arith.constant 0 : index
    %102 = vector.load %arg13[%c0_75, %c0_76, %c0_77] : memref<1x8x26xf32, #tpu.memory_space<vmem>>, vector<1x8x26xf32>
    %103 = vector.shape_cast %102 : vector<1x8x26xf32> to vector<8x26xf32>
    %104 = vector.shape_cast %101 : vector<8x26xf32> to vector<1x8x26xf32>
    tpu.vector_store %arg13[%c0_75, %c0_76, %c0_77], %104 {strides = array<i32>} : memref<1x8x26xf32, #tpu.memory_space<vmem>>, vector<1x8x26xf32>,
    return
  }
  func.func @transform_0(%arg0: i32) -> (i32, i32, i32) {
    %c0_i32 = arith.constant 0 : i32
    %c0_i32_0 = arith.constant 0 : i32
    %c0_i32_1 = arith.constant 0 : i32
    return %arg0, %c0_i32, %c0_i32_0 : i32, i32, i32
  }
  func.func @transform_1(%arg0: i32) -> (i32, i32, i32) {
    %c0_i32 = arith.constant 0 : i32
    %c0_i32_0 = arith.constant 0 : i32
    %c0_i32_1 = arith.constant 0 : i32
    return %arg0, %c0_i32, %c0_i32_0 : i32, i32, i32
  }
  func.func @transform_2(%arg0: i32) -> (i32, i32) {
    %c0_i32 = arith.constant 0 : i32
    %c0_i32_0 = arith.constant 0 : i32
    %c0_i32_1 = arith.constant 0 : i32
    return %c0_i32, %c0_i32_0 : i32, i32
  }
  func.func @transform_3(%arg0: i32) -> (i32, i32, i32) {
    %c0_i32 = arith.constant 0 : i32
    %c0_i32_0 = arith.constant 0 : i32
    %c0_i32_1 = arith.constant 0 : i32
    %c0_i32_2 = arith.constant 0 : i32
    return %c0_i32, %c0_i32_0, %c0_i32_1 : i32, i32, i32
  }
  func.func @transform_4(%arg0: i32) -> (i32, i32) {
    %c0_i32 = arith.constant 0 : i32
    %c0_i32_0 = arith.constant 0 : i32
    %c0_i32_1 = arith.constant 0 : i32
    return %c0_i32, %c0_i32_0 : i32, i32
  }
  func.func @transform_5(%arg0: i32) -> (i32, i32, i32) {
    %c0_i32 = arith.constant 0 : i32
    %c0_i32_0 = arith.constant 0 : i32
    %c0_i32_1 = arith.constant 0 : i32
    %c0_i32_2 = arith.constant 0 : i32
    return %c0_i32, %c0_i32_0, %c0_i32_1 : i32, i32, i32
  }
  func.func @transform_6(%arg0: i32) -> (i32, i32, i32) {
    %c0_i32 = arith.constant 0 : i32
    %c0_i32_0 = arith.constant 0 : i32
    %c0_i32_1 = arith.constant 0 : i32
    %c0_i32_2 = arith.constant 0 : i32
    return %c0_i32, %c0_i32_0, %c0_i32_1 : i32, i32, i32
  }
  func.func @transform_7(%arg0: i32) -> (i32, i32) {
    %c0_i32 = arith.constant 0 : i32
    %c0_i32_0 = arith.constant 0 : i32
    %c0_i32_1 = arith.constant 0 : i32
    return %c0_i32, %c0_i32_0 : i32, i32
  }
  func.func @transform_8(%arg0: i32) -> (i32, i32, i32) {
    %c0_i32 = arith.constant 0 : i32
    %c0_i32_0 = arith.constant 0 : i32
    %c0_i32_1 = arith.constant 0 : i32
    %c0_i32_2 = arith.constant 0 : i32
    return %c0_i32, %c0_i32_0, %c0_i32_1 : i32, i32, i32
  }
  func.func @transform_9(%arg0: i32) -> (i32, i32) {
    %c0_i32 = arith.constant 0 : i32
    %c0_i32_0 = arith.constant 0 : i32
    %c0_i32_1 = arith.constant 0 : i32
    return %c0_i32, %c0_i32_0 : i32, i32
  }
  func.func @transform_10(%arg0: i32) -> (i32, i32, i32) {
    %c0_i32 = arith.constant 0 : i32
    %c0_i32_0 = arith.constant 0 : i32
    %c0_i32_1 = arith.constant 0 : i32
    %c0_i32_2 = arith.constant 0 : i32
    return %c0_i32, %c0_i32_0, %c0_i32_1 : i32, i32, i32
  }
  func.func @transform_11(%arg0: i32) -> (i32, i32) {
    %c0_i32 = arith.constant 0 : i32
    %c0_i32_0 = arith.constant 0 : i32
    %c0_i32_1 = arith.constant 0 : i32
    return %c0_i32, %c0_i32_0 : i32, i32
  }
  func.func @transform_12(%arg0: i32) -> (i32, i32, i32) {
    %c0_i32 = arith.constant 0 : i32
    %c0_i32_0 = arith.constant 0 : i32
    %c0_i32_1 = arith.constant 0 : i32
    return %arg0, %c0_i32, %c0_i32_0 : i32, i32, i32
  }
}

</mosaic_0001>

<llo_original>
// kernel: tpu_custom_call.1
$region0: #{tpu_custom_call.1}
  #allocation0 [shape = 'u32[]', space=smem, size = 0x4, offset = 0x4, fixed_abs, tag = 'smem constant byte address 0x4 - core index']
  #allocation1 [shape = 'u32[144,128]{1,0:T(1,128)}', space=vmem, size = 0x12000, scoped, tag = 'internal scratch']
  %s0 = inlined_call_operand.hbm [shape: f32[2,4,16], index: 0, kind: input, shape index: {}]
  %s1 = inlined_call_operand.hbm [shape: f32[2,8,34], index: 1, kind: input, shape index: {}]
  %s2 = inlined_call_operand.hbm [shape: f32[16,33], index: 2, kind: input, shape index: {}]
  %s3 = inlined_call_operand.vmem [shape: f32[2,8,4], index: 3, kind: input, shape index: {}]
  %s4 = inlined_call_operand.vmem [shape: f32[8,1], index: 4, kind: input, shape index: {}]
  %s5 = inlined_call_operand.vmem [shape: f32[3,8,8], index: 5, kind: input, shape index: {}]
  %s6 = inlined_call_operand.vmem [shape: f32[3,8,8], index: 6, kind: input, shape index: {}]
  %s7 = inlined_call_operand.vmem [shape: f32[8,1], index: 7, kind: input, shape index: {}]
  %s8 = inlined_call_operand.vmem [shape: f32[3,8,8], index: 8, kind: input, shape index: {}]
  %s9 = inlined_call_operand.vmem [shape: f32[8,1], index: 9, kind: input, shape index: {}]
  %s10 = inlined_call_operand.vmem [shape: f32[3,8,8], index: 10, kind: input, shape index: {}]
  %s11 = inlined_call_operand.vmem [shape: f32[8,1], index: 11, kind: input, shape index: {}]
  %s12 = inlined_call_operand.hbm [shape: f32[2,8,26], index: 12, kind: output, shape index: {}]
  %s13 = sld [smem:[#allocation0]]
  $region93: #{tpu_custom_call.1} parent=0
    _
  %s15 = ssub.s32 1, %s13
  %s16 = scalar_select 0, %s15, %s13
  $region1: #{tpu_custom_call.1} parent=0
    #allocation2 [shape = 'u8[4096]{0}', space=vmem, size = 0x1000, scoped, tag = 'input window, operand 0']
    #allocation3 [shape = 's32[2]{0}', space=sflag, size = 0x8, scoped, tag = 'scoped memory for tpu_custom_call.1']
    #allocation4 [shape = 's32[2]{0}', space=sflag, size = 0x8, scoped, tag = 'scoped memory for tpu_custom_call.1']
    #allocation5 [shape = 'u8[8192]{0}', space=vmem, size = 0x2000, scoped, tag = 'input window, operand 1']
    #allocation6 [shape = 's32[2]{0}', space=sflag, size = 0x8, scoped, tag = 'scoped memory for tpu_custom_call.1']
    #allocation7 [shape = 'u8[8192]{0}', space=vmem, size = 0x2000, scoped, tag = 'input window, operand 2, single buffered']
    #allocation8 [shape = 'u8[8192]{0}', space=vmem, size = 0x2000, scoped, tag = 'output window, operand 0']
    %17 = vsyncpa [#allocation3], 0
    %s18 = scalar_lea.sflag [#allocation3], 1
    %19 = vsyncpa %s18, 0
    %20 = vsyncpa [#allocation6], 0
    %s21 = scalar_lea.sflag [#allocation6], 1
    %22 = vsyncpa %s21, 0
    %23 = vsyncpa [#allocation4], 0
    %s24 = scalar_lea.sflag [#allocation4], 1
    %25 = vsyncpa %s24, 0
    loop: start=0, step=1, limit=4
    $region2: #{tpu_custom_call.1} parent=1 // loop_pre_header
      _
    $region3: #{tpu_custom_call.1} parent=1 // loop_header
      %s27 = sphi 0, %s31
      %p28 = scmp.ge.s32.totalorder %s27, 4
      %s37 = sphi 0, %s39
      %s40 = sphi 0, %s37
      %s41 = sphi 0, %s40
      %s57 = sphi 0, %s41
      %s63 = sphi 0, %s65
      %s66 = sphi 0, %s63
      %s67 = sphi 0, %s66
      %s83 = sphi 0, %s67
      %s87 = sphi 0, %s87
      %s89 = sphi 0, %s87
      %s90 = sphi 0, %s89
      %s104 = sphi 0, %s90
      %s108 = sphi 0, %s108
      %s110 = sphi 0, %s108
      %s111 = sphi 0, %s110
      %s125 = sphi 0, %s111
      %s129 = sphi 0, %s129
      %s131 = sphi 0, %s129
      %s132 = sphi 0, %s131
      %s146 = sphi 0, %s132
      %s150 = sphi 0, %s150
      %s152 = sphi 0, %s150
      %s153 = sphi 0, %s152
      %s167 = sphi 0, %s153
      %s171 = sphi 0, %s171
      %s173 = sphi 0, %s171
      %s174 = sphi 0, %s173
      %s188 = sphi 0, %s174
      %s192 = sphi 0, %s192
      %s194 = sphi 0, %s192
      %s195 = sphi 0, %s194
      %s209 = sphi 0, %s195
      %s213 = sphi 0, %s213
      %s215 = sphi 0, %s213
      %s216 = sphi 0, %s215
      %s230 = sphi 0, %s216
      %s234 = sphi 0, %s234
      %s236 = sphi 0, %s234
      %s237 = sphi 0, %s236
      %s251 = sphi 0, %s237
      %s255 = sphi 0, %s255
      %s257 = sphi 0, %s255
      %s258 = sphi 0, %s257
      %s272 = sphi 0, %s258
      %s276 = sphi 0, %s276
      %s278 = sphi 0, %s276
      %s279 = sphi 0, %s278
      %s293 = sphi 0, %s279
      %s299 = sphi 0, %s301
      %s302 = sphi 0, %s299
      %s303 = sphi 0, %s302
      %s319 = sphi 0, %s303
    $region4: #{tpu_custom_call.1} parent=1 // loop_header_branch
      %30 = sbr.rel (%p28) target = $region8
    $region5: #{tpu_custom_call.1} parent=1 // loop_body
      %s32 = ssub.s32 %s27, 1
      %s33 = ssub.s32 %s27, 2
      %s34 = sadd.s32 %s27, 1
      %s35 = ssub.s32 %s27, %s34
      %p36 = scmp.eq.s32.totalorder %s35, 0
      %s38 = sadd.s32 %s37, 1
      %s39 = scalar_select %p36, %s37, %s38
      %p42 = pneg %p36
      %p43 = scmp.eq.s32.totalorder %s27, 1
      %p44 = por %p42, %p43
      %p45 = scmp.ne.s32.totalorder %s37, %s40
      %p46 = scmp.eq.s32.totalorder %s27, 0
      %p47 = por %p45, %p46
      %p48 = scmp.ne.s32.totalorder %s37, %s40
      %p49 = scmp.eq.s32.totalorder %s32, 1
      %p50 = por %p48, %p49
      %p51 = scmp.ne.s32.totalorder %s40, %s41
      %p52 = scmp.eq.s32.totalorder %s32, 0
      %p53 = por %p51, %p52
      %p54 = scmp.ne.s32.totalorder %s40, %s41
      %p55 = scmp.eq.s32.totalorder %s33, 1
      %p56 = por %p54, %p55
      %p58 = scmp.ne.s32.totalorder %s41, %s57
      %p59 = scmp.eq.s32.totalorder %s33, 0
      %p60 = por %p58, %p59
      %s61 = ssub.s32 %s27, %s34
      %p62 = scmp.eq.s32.totalorder %s61, 0
      %s64 = sadd.s32 %s63, 1
      %s65 = scalar_select %p62, %s63, %s64
      %p68 = pneg %p62
      %p69 = scmp.eq.s32.totalorder %s27, 1
      %p70 = por %p68, %p69
      %p71 = scmp.ne.s32.totalorder %s63, %s66
      %p72 = scmp.eq.s32.totalorder %s27, 0
      %p73 = por %p71, %p72
      %p74 = scmp.ne.s32.totalorder %s63, %s66
      %p75 = scmp.eq.s32.totalorder %s32, 1
      %p76 = por %p74, %p75
      %p77 = scmp.ne.s32.totalorder %s66, %s67
      %p78 = scmp.eq.s32.totalorder %s32, 0
      %p79 = por %p77, %p78
      %p80 = scmp.ne.s32.totalorder %s66, %s67
      %p81 = scmp.eq.s32.totalorder %s33, 1
      %p82 = por %p80, %p81
      %p84 = scmp.ne.s32.totalorder %s67, %s83
      %p85 = scmp.eq.s32.totalorder %s33, 0
      %p86 = por %p84, %p85
      %s88 = sadd.s32 %s87, 1
      %p91 = scmp.eq.s32.totalorder %s27, 1
      %p92 = scmp.ne.s32.totalorder %s87, %s89
      %p93 = scmp.eq.s32.totalorder %s27, 0
      %p94 = por %p92, %p93
      %p95 = scmp.ne.s32.totalorder %s87, %s89
      %p96 = scmp.eq.s32.totalorder %s32, 1
      %p97 = por %p95, %p96
      %p98 = scmp.ne.s32.totalorder %s89, %s90
      %p99 = scmp.eq.s32.totalorder %s32, 0
      %p100 = por %p98, %p99
      %p101 = scmp.ne.s32.totalorder %s89, %s90
      %p102 = scmp.eq.s32.totalorder %s33, 1
      %p103 = por %p101, %p102
      %p105 = scmp.ne.s32.totalorder %s90, %s104
      %p106 = scmp.eq.s32.totalorder %s33, 0
      %p107 = por %p105, %p106
      %s109 = sadd.s32 %s108, 1
      %p112 = scmp.eq.s32.totalorder %s27, 1
      %p113 = scmp.ne.s32.totalorder %s108, %s110
      %p114 = scmp.eq.s32.totalorder %s27, 0
      %p115 = por %p113, %p114
      %p116 = scmp.ne.s32.totalorder %s108, %s110
      %p117 = scmp.eq.s32.totalorder %s32, 1
      %p118 = por %p116, %p117
      %p119 = scmp.ne.s32.totalorder %s110, %s111
      %p120 = scmp.eq.s32.totalorder %s32, 0
      %p121 = por %p119, %p120
      %p122 = scmp.ne.s32.totalorder %s110, %s111
      %p123 = scmp.eq.s32.totalorder %s33, 1
      %p124 = por %p122, %p123
      %p126 = scmp.ne.s32.totalorder %s111, %s125
      %p127 = scmp.eq.s32.totalorder %s33, 0
      %p128 = por %p126, %p127
      %s130 = sadd.s32 %s129, 1
      %p133 = scmp.eq.s32.totalorder %s27, 1
      %p134 = scmp.ne.s32.totalorder %s129, %s131
      %p135 = scmp.eq.s32.totalorder %s27, 0
      %p136 = por %p134, %p135
      %p137 = scmp.ne.s32.totalorder %s129, %s131
      %p138 = scmp.eq.s32.totalorder %s32, 1
      %p139 = por %p137, %p138
      %p140 = scmp.ne.s32.totalorder %s131, %s132
      %p141 = scmp.eq.s32.totalorder %s32, 0
      %p142 = por %p140, %p141
      %p143 = scmp.ne.s32.totalorder %s131, %s132
      %p144 = scmp.eq.s32.totalorder %s33, 1
      %p145 = por %p143, %p144
      %p147 = scmp.ne.s32.totalorder %s132, %s146
      %p148 = scmp.eq.s32.totalorder %s33, 0
      %p149 = por %p147, %p148
      %s151 = sadd.s32 %s150, 1
      %p154 = scmp.eq.s32.totalorder %s27, 1
      %p155 = scmp.ne.s32.totalorder %s150, %s152
      %p156 = scmp.eq.s32.totalorder %s27, 0
      %p157 = por %p155, %p156
      %p158 = scmp.ne.s32.totalorder %s150, %s152
      %p159 = scmp.eq.s32.totalorder %s32, 1
      %p160 = por %p158, %p159
      %p161 = scmp.ne.s32.totalorder %s152, %s153
      %p162 = scmp.eq.s32.totalorder %s32, 0
      %p163 = por %p161, %p162
      %p164 = scmp.ne.s32.totalorder %s152, %s153
      %p165 = scmp.eq.s32.totalorder %s33, 1
      %p166 = por %p164, %p165
      %p168 = scmp.ne.s32.totalorder %s153, %s167
      %p169 = scmp.eq.s32.totalorder %s33, 0
      %p170 = por %p168, %p169
      %s172 = sadd.s32 %s171, 1
      %p175 = scmp.eq.s32.totalorder %s27, 1
      %p176 = scmp.ne.s32.totalorder %s171, %s173
      %p177 = scmp.eq.s32.totalorder %s27, 0
      %p178 = por %p176, %p177
      %p179 = scmp.ne.s32.totalorder %s171, %s173
      %p180 = scmp.eq.s32.totalorder %s32, 1
      %p181 = por %p179, %p180
      %p182 = scmp.ne.s32.totalorder %s173, %s174
      %p183 = scmp.eq.s32.totalorder %s32, 0
      %p184 = por %p182, %p183
      %p185 = scmp.ne.s32.totalorder %s173, %s174
      %p186 = scmp.eq.s32.totalorder %s33, 1
      %p187 = por %p185, %p186
      %p189 = scmp.ne.s32.totalorder %s174, %s188
      %p190 = scmp.eq.s32.totalorder %s33, 0
      %p191 = por %p189, %p190
      %s193 = sadd.s32 %s192, 1
      %p196 = scmp.eq.s32.totalorder %s27, 1
      %p197 = scmp.ne.s32.totalorder %s192, %s194
      %p198 = scmp.eq.s32.totalorder %s27, 0
      %p199 = por %p197, %p198
      %p200 = scmp.ne.s32.totalorder %s192, %s194
      %p201 = scmp.eq.s32.totalorder %s32, 1
      %p202 = por %p200, %p201
      %p203 = scmp.ne.s32.totalorder %s194, %s195
      %p204 = scmp.eq.s32.totalorder %s32, 0
      %p205 = por %p203, %p204
      %p206 = scmp.ne.s32.totalorder %s194, %s195
      %p207 = scmp.eq.s32.totalorder %s33, 1
      %p208 = por %p206, %p207
      %p210 = scmp.ne.s32.totalorder %s195, %s209
      %p211 = scmp.eq.s32.totalorder %s33, 0
      %p212 = por %p210, %p211
      %s214 = sadd.s32 %s213, 1
      %p217 = scmp.eq.s32.totalorder %s27, 1
      %p218 = scmp.ne.s32.totalorder %s213, %s215
      %p219 = scmp.eq.s32.totalorder %s27, 0
      %p220 = por %p218, %p219
      %p221 = scmp.ne.s32.totalorder %s213, %s215
      %p222 = scmp.eq.s32.totalorder %s32, 1
      %p223 = por %p221, %p222
      %p224 = scmp.ne.s32.totalorder %s215, %s216
      %p225 = scmp.eq.s32.totalorder %s32, 0
      %p226 = por %p224, %p225
      %p227 = scmp.ne.s32.totalorder %s215, %s216
      %p228 = scmp.eq.s32.totalorder %s33, 1
      %p229 = por %p227, %p228
      %p231 = scmp.ne.s32.totalorder %s216, %s230
      %p232 = scmp.eq.s32.totalorder %s33, 0
      %p233 = por %p231, %p232
      %s235 = sadd.s32 %s234, 1
      %p238 = scmp.eq.s32.totalorder %s27, 1
      %p239 = scmp.ne.s32.totalorder %s234, %s236
      %p240 = scmp.eq.s32.totalorder %s27, 0
      %p241 = por %p239, %p240
      %p242 = scmp.ne.s32.totalorder %s234, %s236
      %p243 = scmp.eq.s32.totalorder %s32, 1
      %p244 = por %p242, %p243
      %p245 = scmp.ne.s32.totalorder %s236, %s237
      %p246 = scmp.eq.s32.totalorder %s32, 0
      %p247 = por %p245, %p246
      %p248 = scmp.ne.s32.totalorder %s236, %s237
      %p249 = scmp.eq.s32.totalorder %s33, 1
      %p250 = por %p248, %p249
      %p252 = scmp.ne.s32.totalorder %s237, %s251
      %p253 = scmp.eq.s32.totalorder %s33, 0
      %p254 = por %p252, %p253
      %s256 = sadd.s32 %s255, 1
      %p259 = scmp.eq.s32.totalorder %s27, 1
      %p260 = scmp.ne.s32.totalorder %s255, %s257
      %p261 = scmp.eq.s32.totalorder %s27, 0
      %p262 = por %p260, %p261
      %p263 = scmp.ne.s32.totalorder %s255, %s257
      %p264 = scmp.eq.s32.totalorder %s32, 1
      %p265 = por %p263, %p264
      %p266 = scmp.ne.s32.totalorder %s257, %s258
      %p267 = scmp.eq.s32.totalorder %s32, 0
      %p268 = por %p266, %p267
      %p269 = scmp.ne.s32.totalorder %s257, %s258
      %p270 = scmp.eq.s32.totalorder %s33, 1
      %p271 = por %p269, %p270
      %p273 = scmp.ne.s32.totalorder %s258, %s272
      %p274 = scmp.eq.s32.totalorder %s33, 0
      %p275 = por %p273, %p274
      %s277 = sadd.s32 %s276, 1
      %p280 = scmp.eq.s32.totalorder %s27, 1
      %p281 = scmp.ne.s32.totalorder %s276, %s278
      %p282 = scmp.eq.s32.totalorder %s27, 0
      %p283 = por %p281, %p282
      %p284 = scmp.ne.s32.totalorder %s276, %s278
      %p285 = scmp.eq.s32.totalorder %s32, 1
      %p286 = por %p284, %p285
      %p287 = scmp.ne.s32.totalorder %s278, %s279
      %p288 = scmp.eq.s32.totalorder %s32, 0
      %p289 = por %p287, %p288
      %p290 = scmp.ne.s32.totalorder %s278, %s279
      %p291 = scmp.eq.s32.totalorder %s33, 1
      %p292 = por %p290, %p291
      %p294 = scmp.ne.s32.totalorder %s279, %s293
      %p295 = scmp.eq.s32.totalorder %s33, 0
      %p296 = por %p294, %p295
      %s297 = ssub.s32 %s27, %s34
      %p298 = scmp.eq.s32.totalorder %s297, 0
      %s300 = sadd.s32 %s299, 1
      %s301 = scalar_select %p298, %s299, %s300
      %p304 = pneg %p298
      %p305 = scmp.eq.s32.totalorder %s27, 1
      %p306 = por %p304, %p305
      %p307 = scmp.ne.s32.totalorder %s299, %s302
      %p308 = scmp.eq.s32.totalorder %s27, 0
      %p309 = por %p307, %p308
      %p310 = scmp.ne.s32.totalorder %s299, %s302
      %p311 = scmp.eq.s32.totalorder %s32, 1
      %p312 = por %p310, %p311
      %p313 = scmp.ne.s32.totalorder %s302, %s303
      %p314 = scmp.eq.s32.totalorder %s32, 0
      %p315 = por %p313, %p314
      %p316 = scmp.ne.s32.totalorder %s302, %s303
      %p317 = scmp.eq.s32.totalorder %s33, 1
      %p318 = por %p316, %p317
      %p320 = scmp.ne.s32.totalorder %s303, %s319
      %p321 = scmp.eq.s32.totalorder %s33, 0
      %p322 = por %p320, %p321
      %p323 = scmp.le.s32.totalorder 1, %s27
      %p324 = scmp.lt.s32.totalorder %s27, 3
      %p325 = pnand %p323, %p324
      %p326 = pneg %p325
      // Predicated region
      $region9: #{tpu_custom_call.1} parent=5 // pred_check
        _
      $region10: #{tpu_custom_call.1} parent=5 // pred_check_branch
        %328 = sbr.rel (%p325) target = $region12
      $region11: #{tpu_custom_call.1} parent=5 // pred_region
        %s329 = ssub.s32 %s27, 1
        // Predicated region
        $region13: #{tpu_custom_call.1} parent=11 // pred_check
          %p330 = pneg %p100
        $region14: #{tpu_custom_call.1} parent=11 // pred_check_branch
          %332 = sbr.rel (%p330) target = $region16
        $region15: #{tpu_custom_call.1} parent=11 // pred_region
          %s334 = ssub.s32 256, 256
          %335 = vsyncadd [#allocation6], %s334
          %s336 = sshll.u32 [#allocation7], 4
          %s337 = int_to_ptr.vmem [resolvable:$true] %s336
          %342 = dma.hbm_to_vmem [thread:$0]  %s2, 256, %s337, [#allocation6], 128, 128, 8
        $region16: #{tpu_custom_call.1} parent=11 // pred_fallthru
          _
        // Predicated region
        $region17: #{tpu_custom_call.1} parent=11 // pred_check
          %p343 = pneg %p121
        $region18: #{tpu_custom_call.1} parent=11 // pred_check_branch
          %345 = sbr.rel (%p343) target = $region20
        $region19: #{tpu_custom_call.1} parent=11 // pred_region
          _
        $region20: #{tpu_custom_call.1} parent=11 // pred_fallthru
          _
        // Predicated region
        $region21: #{tpu_custom_call.1} parent=11 // pred_check
          %p346 = pneg %p142
        $region22: #{tpu_custom_call.1} parent=11 // pred_check_branch
          %348 = sbr.rel (%p346) target = $region24
        $region23: #{tpu_custom_call.1} parent=11 // pred_region
          _
        $region24: #{tpu_custom_call.1} parent=11 // pred_fallthru
          _
        // Predicated region
        $region25: #{tpu_custom_call.1} parent=11 // pred_check
          %p349 = pneg %p163
        $region26: #{tpu_custom_call.1} parent=11 // pred_check_branch
          %351 = sbr.rel (%p349) target = $region28
        $region27: #{tpu_custom_call.1} parent=11 // pred_region
          _
        $region28: #{tpu_custom_call.1} parent=11 // pred_fallthru
          _
        // Predicated region
        $region29: #{tpu_custom_call.1} parent=11 // pred_check
          %p352 = pneg %p184
        $region30: #{tpu_custom_call.1} parent=11 // pred_check_branch
          %354 = sbr.rel (%p352) target = $region32
        $region31: #{tpu_custom_call.1} parent=11 // pred_region
          _
        $region32: #{tpu_custom_call.1} parent=11 // pred_fallthru
          _
        // Predicated region
        $region33: #{tpu_custom_call.1} parent=11 // pred_check
          %p355 = pneg %p205
        $region34: #{tpu_custom_call.1} parent=11 // pred_check_branch
          %357 = sbr.rel (%p355) target = $region36
        $region35: #{tpu_custom_call.1} parent=11 // pred_region
          _
        $region36: #{tpu_custom_call.1} parent=11 // pred_fallthru
          _
        // Predicated region
        $region37: #{tpu_custom_call.1} parent=11 // pred_check
          %p358 = pneg %p226
        $region38: #{tpu_custom_call.1} parent=11 // pred_check_branch
          %360 = sbr.rel (%p358) target = $region40
        $region39: #{tpu_custom_call.1} parent=11 // pred_region
          _
        $region40: #{tpu_custom_call.1} parent=11 // pred_fallthru
          _
        // Predicated region
        $region41: #{tpu_custom_call.1} parent=11 // pred_check
          %p361 = pneg %p247
        $region42: #{tpu_custom_call.1} parent=11 // pred_check_branch
          %363 = sbr.rel (%p361) target = $region44
        $region43: #{tpu_custom_call.1} parent=11 // pred_region
          _
        $region44: #{tpu_custom_call.1} parent=11 // pred_fallthru
          _
        // Predicated region
        $region45: #{tpu_custom_call.1} parent=11 // pred_check
          %p364 = pneg %p268
        $region46: #{tpu_custom_call.1} parent=11 // pred_check_branch
          %366 = sbr.rel (%p364) target = $region48
        $region47: #{tpu_custom_call.1} parent=11 // pred_region
          _
        $region48: #{tpu_custom_call.1} parent=11 // pred_fallthru
          _
        // Predicated region
        $region49: #{tpu_custom_call.1} parent=11 // pred_check
          %p367 = pneg %p289
        $region50: #{tpu_custom_call.1} parent=11 // pred_check_branch
          %369 = sbr.rel (%p367) target = $region52
        $region51: #{tpu_custom_call.1} parent=11 // pred_region
          _
        $region52: #{tpu_custom_call.1} parent=11 // pred_fallthru
          _
      $region12: #{tpu_custom_call.1} parent=5 // pred_fallthru
        _
      %p370 = scmp.lt.s32.totalorder %s27, 2
      // Predicated region
      $region53: #{tpu_custom_call.1} parent=5 // pred_check
        %p371 = pneg %p370
      $region54: #{tpu_custom_call.1} parent=5 // pred_check_branch
        %373 = sbr.rel (%p371) target = $region56
      $region55: #{tpu_custom_call.1} parent=5 // pred_region
        // Predicated region
        $region57: #{tpu_custom_call.1} parent=55 // pred_check
          %p374 = pneg %p47
        $region58: #{tpu_custom_call.1} parent=55 // pred_check_branch
          %376 = sbr.rel (%p374) target = $region60
        $region59: #{tpu_custom_call.1} parent=55 // pred_region
          %s377 = sand.u32 %s37, 1
          %s378 = scalar_lea.sflag [#allocation3], %s377
          %s379 = sand.u32 %s37, 1
          %s380 = smul.addr %s379, 4
          %s381 = scalar_lea.vmem [#allocation2], %s380
          %s383 = ssub.s32 64, 64
          %384 = vsyncadd %s378, %s383
          %s385 = smul.addr %s27, 64
          %s386 = scalar_lea.hbm %s0, %s385
          %s388 = sshll.u32 %s381, 4
          %s389 = int_to_ptr.vmem [resolvable:$true] %s388
          %391 = dma.hbm_to_vmem [thread:$0]  %s386, 64, %s389, %s378
        $region60: #{tpu_custom_call.1} parent=55 // pred_fallthru
          _
        // Predicated region
        $region61: #{tpu_custom_call.1} parent=55 // pred_check
          %p392 = pneg %p73
        $region62: #{tpu_custom_call.1} parent=55 // pred_check_branch
          %394 = sbr.rel (%p392) target = $region64
        $region63: #{tpu_custom_call.1} parent=55 // pred_region
          %s395 = sand.u32 %s27, 1
          %s396 = scalar_lea.sflag [#allocation6], %s395
          %s397 = sand.u32 %s63, 1
          %s398 = smul.addr %s397, 8
          %s399 = scalar_lea.vmem [#allocation5], %s398
          %s401 = ssub.s32 128, 128
          %402 = vsyncadd %s396, %s401
          %s403 = smul.addr %s27, 128
          %s404 = scalar_lea.hbm %s1, %s403
          %s406 = sshll.u32 %s399, 4
          %s407 = int_to_ptr.vmem [resolvable:$true] %s406
          %409 = dma.hbm_to_vmem [thread:$0]  %s404, 128, %s407, %s396
        $region64: #{tpu_custom_call.1} parent=55 // pred_fallthru
          _
      $region56: #{tpu_custom_call.1} parent=5 // pred_fallthru
        _
      %p410 = scmp.le.s32.totalorder 1, %s27
      %p411 = scmp.lt.s32.totalorder %s27, 3
      %p412 = pnand %p410, %p411
      %p413 = pneg %p412
      // Predicated region
      $region65: #{tpu_custom_call.1} parent=5 // pred_check
        _
      $region66: #{tpu_custom_call.1} parent=5 // pred_check_branch
        %415 = sbr.rel (%p412) target = $region68
      $region67: #{tpu_custom_call.1} parent=5 // pred_region
        %s416 = ssub.s32 %s27, 1
        %s417 = sand.u32 %s40, 1
        %s418 = scalar_lea.sflag [#allocation3], %s417
        %s419 = sand.u32 %s40, 1
        %s420 = smul.addr %s419, 4
        %s421 = scalar_lea.vmem [#allocation2], %s420
        // Predicated region
        $region69: #{tpu_custom_call.1} parent=67 // pred_check
          %p422 = pneg %p53
        $region70: #{tpu_custom_call.1} parent=67 // pred_check_branch
          %424 = sbr.rel (%p422) target = $region72
        $region71: #{tpu_custom_call.1} parent=67 // pred_region
          %425 = dma.done %s418, 64
        $region72: #{tpu_custom_call.1} parent=67 // pred_fallthru
          _
        %s426 = sand.u32 %s32, 1
        %s427 = scalar_lea.sflag [#allocation6], %s426
        %s428 = sand.u32 %s66, 1
        %s429 = smul.addr %s428, 8
        %s430 = scalar_lea.vmem [#allocation5], %s429
        // Predicated region
        $region73: #{tpu_custom_call.1} parent=67 // pred_check
          %p431 = pneg %p79
        $region74: #{tpu_custom_call.1} parent=67 // pred_check_branch
          %433 = sbr.rel (%p431) target = $region76
        $region75: #{tpu_custom_call.1} parent=67 // pred_region
          %434 = dma.done %s427, 128
        $region76: #{tpu_custom_call.1} parent=67 // pred_fallthru
          _
        // Predicated region
        $region77: #{tpu_custom_call.1} parent=67 // pred_check
          %p435 = pneg %p100
        $region78: #{tpu_custom_call.1} parent=67 // pred_check_branch
          %437 = sbr.rel (%p435) target = $region80
        $region79: #{tpu_custom_call.1} parent=67 // pred_region
          %438 = dma.done [#allocation6], 256
        $region80: #{tpu_custom_call.1} parent=67 // pred_fallthru
          _
        %s439 = sand.u32 %s40, 1
        %s440 = scalar_lea.sflag [#allocation3], %s439
        %s441 = sand.u32 %s40, 1
        %s442 = smul.addr %s441, 4
        %s443 = scalar_lea.vmem [#allocation2], %s442
        %p444 = pneg %p53
        %p445 = pneg %p50
        %s446 = sand.u32 %s32, 1
        %s447 = scalar_lea.sflag [#allocation6], %s446
        %s448 = sand.u32 %s66, 1
        %s449 = smul.addr %s448, 8
        %s450 = scalar_lea.vmem [#allocation5], %s449
        %p451 = pneg %p79
        %p452 = pneg %p76
        %p453 = pneg %p100
        %p454 = pneg %p97
        %p455 = pneg %p121
        %p456 = pneg %p118
        %p457 = pneg %p142
        %p458 = pneg %p139
        %p459 = pneg %p163
        %p460 = pneg %p160
        %p461 = pneg %p184
        %p462 = pneg %p181
        %p463 = pneg %p205
        %p464 = pneg %p202
        %p465 = pneg %p226
        %p466 = pneg %p223
        %p467 = pneg %p247
        %p468 = pneg %p244
        %p469 = pneg %p268
        %p470 = pneg %p265
        %p471 = pneg %p289
        %p472 = pneg %p286
        %p473 = pneg %p315
        %p474 = pneg %p312
        %s475 = sand.u32 %s302, 1
        %s476 = scalar_lea.sflag [#allocation4], %s475
        %s477 = sand.u32 %s302, 1
        %s478 = smul.addr %s477, 8
        %s479 = scalar_lea.vmem [#allocation8], %s478
        %v480 = vld [vmem:[%s421] sm:$0xf]
        %v481 = vld [vmem:[#allocation7] sm:$0xff]
        %v482 = vld [vmem:[#allocation7 + $0x8] sm:$0xff]
        %vm483 = vcmask 130048
        %v485 = vsel %vm483, %v480, 0
        %487 = vmatprep.subr.mxu0 0.0
        %488 = vmatpush1.msra.mxu0 %v481
        %489 = vmatprep.subr.mxu0 0.0
        %490 = vmatpush1.msra.mxu0 %v482
        %491 = vmatprep.subr.mxu0 0.0
        %492 = vmatpush1.msra.mxu0 0.0
        %493 = vmatprep.subr.mxu0 0.0
        %494 = vmatpush1.msra.mxu0 0.0
        %495 = vmatprep.subr.mxu0 0.0
        %496 = vmatpush1.msra.mxu0 0.0
        %497 = vmatprep.subr.mxu0 0.0
        %498 = vmatpush1.msra.mxu0 0.0
        %499 = vmatprep.subr.mxu0 0.0
        %500 = vmatpush1.msra.mxu0 0.0
        %501 = vmatprep.subr.mxu0 0.0
        %502 = vmatpush1.msra.mxu0 0.0
        %503 = vmatprep.subr.mxu0 0.0
        %504 = vmatpush1.msra.mxu0 0.0
        %505 = vmatprep.subr.mxu0 0.0
        %506 = vmatpush1.msra.mxu0 0.0
        %507 = vmatprep.subr.mxu0 0.0
        %508 = vmatpush1.msra.mxu0 0.0
        %509 = vmatprep.subr.mxu0 0.0
        %510 = vmatpush1.msra.mxu0 0.0
        %511 = vmatprep.subr.mxu0 0.0
        %512 = vmatpush1.msra.mxu0 0.0
        %513 = vmatprep.subr.mxu0 0.0
        %514 = vmatpush1.msra.mxu0 0.0
        %515 = vmatprep.subr.mxu0 0.0
        %516 = vmatpush1.msra.mxu0 0.0
        %517 = vmatprep.subr.mxu0 0.0
        %518 = vmatpush1.msra.mxu0 0.0
        %519 = vmatprep.subr.mxu0 0.0
        %520 = vmatpush1.msra.mxu0 0.0
        %521 = vmatprep.subr.mxu0 0.0
        %522 = vmatpush1.msra.mxu0 0.0
        %523 = vmatprep.subr.mxu0 0.0
        %524 = vmatpush1.msra.mxu0 0.0
        %525 = vmatprep.subr.mxu0 0.0
        %526 = vmatpush1.msra.mxu0 0.0
        %527 = vmatprep.subr.mxu0 0.0
        %528 = vmatpush1.msra.mxu0 0.0
        %529 = vmatprep.subr.mxu0 0.0
        %530 = vmatpush1.msra.mxu0 0.0
        %531 = vmatprep.subr.mxu0 0.0
        %532 = vmatpush1.msra.mxu0 0.0
        %533 = vmatprep.subr.mxu0 0.0
        %534 = vmatpush1.msra.mxu0 0.0
        %535 = vmatprep.subr.mxu0 0.0
        %536 = vmatpush1.msra.mxu0 0.0
        %537 = vmatprep.subr.mxu0 0.0
        %538 = vmatpush1.msra.mxu0 0.0
        %539 = vmatprep.subr.mxu0 0.0
        %540 = vmatpush1.msra.mxu0 0.0
        %541 = vmatprep.subr.mxu0 0.0
        %542 = vmatpush1.msra.mxu0 0.0
        %543 = vmatprep.subr.mxu0 0.0
        %544 = vmatpush1.msra.mxu0 0.0
        %545 = vmatprep.subr.mxu0 0.0
        %546 = vmatpush1.msra.mxu0 0.0
        %547 = vmatprep.subr.mxu0 0.0
        %548 = vmatpush1.msra.mxu0 0.0
        %549 = vmatprep.subr.mxu0 0.0
        %550 = vmatpush1.msra.mxu0 0.0
        %551 = vmatprep.mubr.f32.mxu0 0.0
        %552 = vmatmul.mubr.f32.gmra.mrb[0].mxu0 %v485
        %v553 = vpop.f32.mrb[0].mxu0
        %v554 = vadd.f32 0.0, %v553
        %v555 = vpop.f32.mrb[0].mxu0
        %556 = vdwg.mxu0
        %v557 = vld [vmem:[%s3] sm:$0xff]
        %s558 = scalar_lea.vmem %s3, 8
        %v559 = vld [vmem:[%s558] sm:$0xff]
        %561 = vrot.lane.b32.xlu0 %v554, 127
        %v562 = vpop.permute.xlu0 %561
        %vm563 = vcmask 31744
        %v565 = vsel %vm563, %v559, 0
        %vm567 = vcmask 1043456
        %v568 = vsel %vm567, %v562, 0
        %570 = vmatprep.subr.mxu0 0.0
        %571 = vmatpush1.msra.mxu0 %v568
        %572 = vmatprep.subr.mxu0 0.0
        %573 = vmatpush1.msra.mxu0 0.0
        %574 = vmatprep.subr.mxu0 0.0
        %575 = vmatpush1.msra.mxu0 0.0
        %576 = vmatprep.subr.mxu0 0.0
        %577 = vmatpush1.msra.mxu0 0.0
        %578 = vmatprep.subr.mxu0 0.0
        %579 = vmatpush1.msra.mxu0 0.0
        %580 = vmatprep.subr.mxu0 0.0
        %581 = vmatpush1.msra.mxu0 0.0
        %582 = vmatprep.subr.mxu0 0.0
        %583 = vmatpush1.msra.mxu0 0.0
        %584 = vmatprep.subr.mxu0 0.0
        %585 = vmatpush1.msra.mxu0 0.0
        %586 = vmatprep.subr.mxu0 0.0
        %587 = vmatpush1.msra.mxu0 0.0
        %588 = vmatprep.subr.mxu0 0.0
        %589 = vmatpush1.msra.mxu0 0.0
        %590 = vmatprep.subr.mxu0 0.0
        %591 = vmatpush1.msra.mxu0 0.0
        %592 = vmatprep.subr.mxu0 0.0
        %593 = vmatpush1.msra.mxu0 0.0
        %594 = vmatprep.subr.mxu0 0.0
        %595 = vmatpush1.msra.mxu0 0.0
        %596 = vmatprep.subr.mxu0 0.0
        %597 = vmatpush1.msra.mxu0 0.0
        %598 = vmatprep.subr.mxu0 0.0
        %599 = vmatpush1.msra.mxu0 0.0
        %600 = vmatprep.subr.mxu0 0.0
        %601 = vmatpush1.msra.mxu0 0.0
        %602 = vmatprep.subr.mxu0 0.0
        %603 = vmatpush1.msra.mxu0 0.0
        %604 = vmatprep.subr.mxu0 0.0
        %605 = vmatpush1.msra.mxu0 0.0
        %606 = vmatprep.subr.mxu0 0.0
        %607 = vmatpush1.msra.mxu0 0.0
        %608 = vmatprep.subr.mxu0 0.0
        %609 = vmatpush1.msra.mxu0 0.0
        %610 = vmatprep.subr.mxu0 0.0
        %611 = vmatpush1.msra.mxu0 0.0
        %612 = vmatprep.subr.mxu0 0.0
        %613 = vmatpush1.msra.mxu0 0.0
        %614 = vmatprep.subr.mxu0 0.0
        %615 = vmatpush1.msra.mxu0 0.0
        %616 = vmatprep.subr.mxu0 0.0
        %617 = vmatpush1.msra.mxu0 0.0
        %618 = vmatprep.subr.mxu0 0.0
        %619 = vmatpush1.msra.mxu0 0.0
        %620 = vmatprep.subr.mxu0 0.0
        %621 = vmatpush1.msra.mxu0 0.0
        %622 = vmatprep.subr.mxu0 0.0
        %623 = vmatpush1.msra.mxu0 0.0
        %624 = vmatprep.subr.mxu0 0.0
        %625 = vmatpush1.msra.mxu0 0.0
        %626 = vmatprep.subr.mxu0 0.0
        %627 = vmatpush1.msra.mxu0 0.0
        %628 = vmatprep.subr.mxu0 0.0
        %629 = vmatpush1.msra.mxu0 0.0
        %630 = vmatprep.subr.mxu0 0.0
        %631 = vmatpush1.msra.mxu0 0.0
        %632 = vmatprep.subr.mxu0 0.0
        %633 = vmatpush1.msra.mxu0 0.0
        %634 = vmatprep.mubr.f32.mxu0 0.0
        %635 = vmatmul.mubr.f32.gmra.mrb[0].mxu0 %v565
        %v636 = vpop.f32.mrb[0].mxu0
        %v637 = vadd.f32 0.0, %v636
        %v638 = vpop.f32.mrb[0].mxu0
        %639 = vdwg.mxu0
        %v641 = vsel %vm563, %v557, 0
        %v643 = vsel %vm567, %v554, 0
        %645 = vmatprep.subr.mxu0 0.0
        %646 = vmatpush1.msra.mxu0 %v643
        %647 = vmatprep.subr.mxu0 0.0
        %648 = vmatpush1.msra.mxu0 0.0
        %649 = vmatprep.subr.mxu0 0.0
        %650 = vmatpush1.msra.mxu0 0.0
        %651 = vmatprep.subr.mxu0 0.0
        %652 = vmatpush1.msra.mxu0 0.0
        %653 = vmatprep.subr.mxu0 0.0
        %654 = vmatpush1.msra.mxu0 0.0
        %655 = vmatprep.subr.mxu0 0.0
        %656 = vmatpush1.msra.mxu0 0.0
        %657 = vmatprep.subr.mxu0 0.0
        %658 = vmatpush1.msra.mxu0 0.0
        %659 = vmatprep.subr.mxu0 0.0
        %660 = vmatpush1.msra.mxu0 0.0
        %661 = vmatprep.subr.mxu0 0.0
        %662 = vmatpush1.msra.mxu0 0.0
        %663 = vmatprep.subr.mxu0 0.0
        %664 = vmatpush1.msra.mxu0 0.0
        %665 = vmatprep.subr.mxu0 0.0
        %666 = vmatpush1.msra.mxu0 0.0
        %667 = vmatprep.subr.mxu0 0.0
        %668 = vmatpush1.msra.mxu0 0.0
        %669 = vmatprep.subr.mxu0 0.0
        %670 = vmatpush1.msra.mxu0 0.0
        %671 = vmatprep.subr.mxu0 0.0
        %672 = vmatpush1.msra.mxu0 0.0
        %673 = vmatprep.subr.mxu0 0.0
        %674 = vmatpush1.msra.mxu0 0.0
        %675 = vmatprep.subr.mxu0 0.0
        %676 = vmatpush1.msra.mxu0 0.0
        %677 = vmatprep.subr.mxu0 0.0
        %678 = vmatpush1.msra.mxu0 0.0
        %679 = vmatprep.subr.mxu0 0.0
        %680 = vmatpush1.msra.mxu0 0.0
        %681 = vmatprep.subr.mxu0 0.0
        %682 = vmatpush1.msra.mxu0 0.0
        %683 = vmatprep.subr.mxu0 0.0
        %684 = vmatpush1.msra.mxu0 0.0
        %685 = vmatprep.subr.mxu0 0.0
        %686 = vmatpush1.msra.mxu0 0.0
        %687 = vmatprep.subr.mxu0 0.0
        %688 = vmatpush1.msra.mxu0 0.0
        %689 = vmatprep.subr.mxu0 0.0
        %690 = vmatpush1.msra.mxu0 0.0
        %691 = vmatprep.subr.mxu0 0.0
        %692 = vmatpush1.msra.mxu0 0.0
        %693 = vmatprep.subr.mxu0 0.0
        %694 = vmatpush1.msra.mxu0 0.0
        %695 = vmatprep.subr.mxu0 0.0
        %696 = vmatpush1.msra.mxu0 0.0
        %697 = vmatprep.subr.mxu0 0.0
        %698 = vmatpush1.msra.mxu0 0.0
        %699 = vmatprep.subr.mxu0 0.0
        %700 = vmatpush1.msra.mxu0 0.0
        %701 = vmatprep.subr.mxu0 0.0
        %702 = vmatpush1.msra.mxu0 0.0
        %703 = vmatprep.subr.mxu0 0.0
        %704 = vmatpush1.msra.mxu0 0.0
        %705 = vmatprep.subr.mxu0 0.0
        %706 = vmatpush1.msra.mxu0 0.0
        %707 = vmatprep.subr.mxu0 0.0
        %708 = vmatpush1.msra.mxu0 0.0
        %709 = vmatprep.mubr.f32.mxu0 0.0
        %710 = vmatmul.mubr.f32.gmra.mrb[0].mxu0 %v641
        %v711 = vpop.f32.mrb[0].mxu0
        %v712 = vadd.f32 %v637, %v711
        %v713 = vpop.f32.mrb[0].mxu0
        %714 = vdwg.mxu0
        %v715 = vld [vmem:[%s4] sm:$0xff]
        %717 = vset.pattern.permute.xlu0 0
        %718 = vperm.xlu0 %717, %v715
        %v719 = vpop.permute.xlu0 %718
        %v721 = vadd.f32 %v712, %v719
        %vm722 = vcmp.ge.f32.partialorder %v721, 0.0
        %v723 = vmul.f32 %v721, 0.01
        %v724 = vsel %vm722, %v721, %v723
        %v725 = vld [vmem:[%s430] sm:$0xff]
        %v726 = vld [vmem:[%s5] sm:$0xff]
        %s727 = scalar_lea.vmem %s5, 8
        %v728 = vld [vmem:[%s727] sm:$0xff]
        %730 = vrot.lane.b32.xlu0 %v724, 127
        %v731 = vpop.permute.xlu0 %730
        %vm733 = vcmask 64512
        %v735 = vsel %vm733, %v728, 0
        %737 = vmatprep.subr.mxu0 0.0
        %738 = vmatpush1.msra.mxu0 %v731
        %739 = vmatprep.subr.mxu0 0.0
        %740 = vmatpush1.msra.mxu0 0.0
        %741 = vmatprep.subr.mxu0 0.0
        %742 = vmatpush1.msra.mxu0 0.0
        %743 = vmatprep.subr.mxu0 0.0
        %744 = vmatpush1.msra.mxu0 0.0
        %745 = vmatprep.subr.mxu0 0.0
        %746 = vmatpush1.msra.mxu0 0.0
        %747 = vmatprep.subr.mxu0 0.0
        %748 = vmatpush1.msra.mxu0 0.0
        %749 = vmatprep.subr.mxu0 0.0
        %750 = vmatpush1.msra.mxu0 0.0
        %751 = vmatprep.subr.mxu0 0.0
        %752 = vmatpush1.msra.mxu0 0.0
        %753 = vmatprep.subr.mxu0 0.0
        %754 = vmatpush1.msra.mxu0 0.0
        %755 = vmatprep.subr.mxu0 0.0
        %756 = vmatpush1.msra.mxu0 0.0
        %757 = vmatprep.subr.mxu0 0.0
        %758 = vmatpush1.msra.mxu0 0.0
        %759 = vmatprep.subr.mxu0 0.0
        %760 = vmatpush1.msra.mxu0 0.0
        %761 = vmatprep.subr.mxu0 0.0
        %762 = vmatpush1.msra.mxu0 0.0
        %763 = vmatprep.subr.mxu0 0.0
        %764 = vmatpush1.msra.mxu0 0.0
        %765 = vmatprep.subr.mxu0 0.0
        %766 = vmatpush1.msra.mxu0 0.0
        %767 = vmatprep.subr.mxu0 0.0
        %768 = vmatpush1.msra.mxu0 0.0
        %769 = vmatprep.subr.mxu0 0.0
        %770 = vmatpush1.msra.mxu0 0.0
        %771 = vmatprep.subr.mxu0 0.0
        %772 = vmatpush1.msra.mxu0 0.0
        %773 = vmatprep.subr.mxu0 0.0
        %774 = vmatpush1.msra.mxu0 0.0
        %775 = vmatprep.subr.mxu0 0.0
        %776 = vmatpush1.msra.mxu0 0.0
        %777 = vmatprep.subr.mxu0 0.0
        %778 = vmatpush1.msra.mxu0 0.0
        %779 = vmatprep.subr.mxu0 0.0
        %780 = vmatpush1.msra.mxu0 0.0
        %781 = vmatprep.subr.mxu0 0.0
        %782 = vmatpush1.msra.mxu0 0.0
        %783 = vmatprep.subr.mxu0 0.0
        %784 = vmatpush1.msra.mxu0 0.0
        %785 = vmatprep.subr.mxu0 0.0
        %786 = vmatpush1.msra.mxu0 0.0
        %787 = vmatprep.subr.mxu0 0.0
        %788 = vmatpush1.msra.mxu0 0.0
        %789 = vmatprep.subr.mxu0 0.0
        %790 = vmatpush1.msra.mxu0 0.0
        %791 = vmatprep.subr.mxu0 0.0
        %792 = vmatpush1.msra.mxu0 0.0
        %793 = vmatprep.subr.mxu0 0.0
        %794 = vmatpush1.msra.mxu0 0.0
        %795 = vmatprep.subr.mxu0 0.0
        %796 = vmatpush1.msra.mxu0 0.0
        %797 = vmatprep.subr.mxu0 0.0
        %798 = vmatpush1.msra.mxu0 0.0
        %799 = vmatprep.subr.mxu0 0.0
        %800 = vmatpush1.msra.mxu0 0.0
        %801 = vmatprep.mubr.f32.mxu0 0.0
        %802 = vmatmul.mubr.f32.gmra.mrb[0].mxu0 %v735
        %v803 = vpop.f32.mrb[0].mxu0
        %v804 = vadd.f32 0.0, %v803
        %v805 = vpop.f32.mrb[0].mxu0
        %806 = vdwg.mxu0
        %v808 = vsel %vm733, %v726, 0
        %810 = vmatprep.subr.mxu0 0.0
        %811 = vmatpush1.msra.mxu0 %v724
        %812 = vmatprep.subr.mxu0 0.0
        %813 = vmatpush1.msra.mxu0 0.0
        %814 = vmatprep.subr.mxu0 0.0
        %815 = vmatpush1.msra.mxu0 0.0
        %816 = vmatprep.subr.mxu0 0.0
        %817 = vmatpush1.msra.mxu0 0.0
        %818 = vmatprep.subr.mxu0 0.0
        %819 = vmatpush1.msra.mxu0 0.0
        %820 = vmatprep.subr.mxu0 0.0
        %821 = vmatpush1.msra.mxu0 0.0
        %822 = vmatprep.subr.mxu0 0.0
        %823 = vmatpush1.msra.mxu0 0.0
        %824 = vmatprep.subr.mxu0 0.0
        %825 = vmatpush1.msra.mxu0 0.0
        %826 = vmatprep.subr.mxu0 0.0
        %827 = vmatpush1.msra.mxu0 0.0
        %828 = vmatprep.subr.mxu0 0.0
        %829 = vmatpush1.msra.mxu0 0.0
        %830 = vmatprep.subr.mxu0 0.0
        %831 = vmatpush1.msra.mxu0 0.0
        %832 = vmatprep.subr.mxu0 0.0
        %833 = vmatpush1.msra.mxu0 0.0
        %834 = vmatprep.subr.mxu0 0.0
        %835 = vmatpush1.msra.mxu0 0.0
        %836 = vmatprep.subr.mxu0 0.0
        %837 = vmatpush1.msra.mxu0 0.0
        %838 = vmatprep.subr.mxu0 0.0
        %839 = vmatpush1.msra.mxu0 0.0
        %840 = vmatprep.subr.mxu0 0.0
        %841 = vmatpush1.msra.mxu0 0.0
        %842 = vmatprep.subr.mxu0 0.0
        %843 = vmatpush1.msra.mxu0 0.0
        %844 = vmatprep.subr.mxu0 0.0
        %845 = vmatpush1.msra.mxu0 0.0
        %846 = vmatprep.subr.mxu0 0.0
        %847 = vmatpush1.msra.mxu0 0.0
        %848 = vmatprep.subr.mxu0 0.0
        %849 = vmatpush1.msra.mxu0 0.0
        %850 = vmatprep.subr.mxu0 0.0
        %851 = vmatpush1.msra.mxu0 0.0
        %852 = vmatprep.subr.mxu0 0.0
        %853 = vmatpush1.msra.mxu0 0.0
        %854 = vmatprep.subr.mxu0 0.0
        %855 = vmatpush1.msra.mxu0 0.0
        %856 = vmatprep.subr.mxu0 0.0
        %857 = vmatpush1.msra.mxu0 0.0
        %858 = vmatprep.subr.mxu0 0.0
        %859 = vmatpush1.msra.mxu0 0.0
        %860 = vmatprep.subr.mxu0 0.0
        %861 = vmatpush1.msra.mxu0 0.0
        %862 = vmatprep.subr.mxu0 0.0
        %863 = vmatpush1.msra.mxu0 0.0
        %864 = vmatprep.subr.mxu0 0.0
        %865 = vmatpush1.msra.mxu0 0.0
        %866 = vmatprep.subr.mxu0 0.0
        %867 = vmatpush1.msra.mxu0 0.0
        %868 = vmatprep.subr.mxu0 0.0
        %869 = vmatpush1.msra.mxu0 0.0
        %870 = vmatprep.subr.mxu0 0.0
        %871 = vmatpush1.msra.mxu0 0.0
        %872 = vmatprep.subr.mxu0 0.0
        %873 = vmatpush1.msra.mxu0 0.0
        %874 = vmatprep.mubr.f32.mxu0 0.0
        %875 = vmatmul.mubr.f32.gmra.mrb[0].mxu0 %v808
        %v876 = vpop.f32.mrb[0].mxu0
        %v877 = vadd.f32 %v804, %v876
        %v878 = vpop.f32.mrb[0].mxu0
        %879 = vdwg.mxu0
        %s880 = scalar_lea.vmem %s5, 16
        %v881 = vld [vmem:[%s880] sm:$0xff]
        %882 = vrot.lane.b32.xlu0 %v724, 126
        %v883 = vpop.permute.xlu0 %882
        %v886 = vsel %vm733, %v881, 0
        %888 = vmatprep.subr.mxu0 0.0
        %889 = vmatpush1.msra.mxu0 %v883
        %890 = vmatprep.subr.mxu0 0.0
        %891 = vmatpush1.msra.mxu0 0.0
        %892 = vmatprep.subr.mxu0 0.0
        %893 = vmatpush1.msra.mxu0 0.0
        %894 = vmatprep.subr.mxu0 0.0
        %895 = vmatpush1.msra.mxu0 0.0
        %896 = vmatprep.subr.mxu0 0.0
        %897 = vmatpush1.msra.mxu0 0.0
        %898 = vmatprep.subr.mxu0 0.0
        %899 = vmatpush1.msra.mxu0 0.0
        %900 = vmatprep.subr.mxu0 0.0
        %901 = vmatpush1.msra.mxu0 0.0
        %902 = vmatprep.subr.mxu0 0.0
        %903 = vmatpush1.msra.mxu0 0.0
        %904 = vmatprep.subr.mxu0 0.0
        %905 = vmatpush1.msra.mxu0 0.0
        %906 = vmatprep.subr.mxu0 0.0
        %907 = vmatpush1.msra.mxu0 0.0
        %908 = vmatprep.subr.mxu0 0.0
        %909 = vmatpush1.msra.mxu0 0.0
        %910 = vmatprep.subr.mxu0 0.0
        %911 = vmatpush1.msra.mxu0 0.0
        %912 = vmatprep.subr.mxu0 0.0
        %913 = vmatpush1.msra.mxu0 0.0
        %914 = vmatprep.subr.mxu0 0.0
        %915 = vmatpush1.msra.mxu0 0.0
        %916 = vmatprep.subr.mxu0 0.0
        %917 = vmatpush1.msra.mxu0 0.0
        %918 = vmatprep.subr.mxu0 0.0
        %919 = vmatpush1.msra.mxu0 0.0
        %920 = vmatprep.subr.mxu0 0.0
        %921 = vmatpush1.msra.mxu0 0.0
        %922 = vmatprep.subr.mxu0 0.0
        %923 = vmatpush1.msra.mxu0 0.0
        %924 = vmatprep.subr.mxu0 0.0
        %925 = vmatpush1.msra.mxu0 0.0
        %926 = vmatprep.subr.mxu0 0.0
        %927 = vmatpush1.msra.mxu0 0.0
        %928 = vmatprep.subr.mxu0 0.0
        %929 = vmatpush1.msra.mxu0 0.0
        %930 = vmatprep.subr.mxu0 0.0
        %931 = vmatpush1.msra.mxu0 0.0
        %932 = vmatprep.subr.mxu0 0.0
        %933 = vmatpush1.msra.mxu0 0.0
        %934 = vmatprep.subr.mxu0 0.0
        %935 = vmatpush1.msra.mxu0 0.0
        %936 = vmatprep.subr.mxu0 0.0
        %937 = vmatpush1.msra.mxu0 0.0
        %938 = vmatprep.subr.mxu0 0.0
        %939 = vmatpush1.msra.mxu0 0.0
        %940 = vmatprep.subr.mxu0 0.0
        %941 = vmatpush1.msra.mxu0 0.0
        %942 = vmatprep.subr.mxu0 0.0
        %943 = vmatpush1.msra.mxu0 0.0
        %944 = vmatprep.subr.mxu0 0.0
        %945 = vmatpush1.msra.mxu0 0.0
        %946 = vmatprep.subr.mxu0 0.0
        %947 = vmatpush1.msra.mxu0 0.0
        %948 = vmatprep.subr.mxu0 0.0
        %949 = vmatpush1.msra.mxu0 0.0
        %950 = vmatprep.subr.mxu0 0.0
        %951 = vmatpush1.msra.mxu0 0.0
        %952 = vmatprep.mubr.f32.mxu0 0.0
        %953 = vmatmul.mubr.f32.gmra.mrb[0].mxu0 %v886
        %v954 = vpop.f32.mrb[0].mxu0
        %v955 = vadd.f32 0.0, %v954
        %v956 = vpop.f32.mrb[0].mxu0
        %957 = vdwg.mxu0
        %v958 = vadd.f32 %v877, %v955
        %v959 = vld [vmem:[%s6] sm:$0xff]
        %s960 = scalar_lea.vmem %s6, 8
        %v961 = vld [vmem:[%s960] sm:$0xff]
        %963 = vrot.lane.b32.xlu0 %v725, 126
        %v964 = vpop.permute.xlu0 %963
        %v967 = vsel %vm733, %v961, 0
        %969 = vmatprep.subr.mxu0 0.0
        %970 = vmatpush1.msra.mxu0 %v964
        %971 = vmatprep.subr.mxu0 0.0
        %972 = vmatpush1.msra.mxu0 0.0
        %973 = vmatprep.subr.mxu0 0.0
        %974 = vmatpush1.msra.mxu0 0.0
        %975 = vmatprep.subr.mxu0 0.0
        %976 = vmatpush1.msra.mxu0 0.0
        %977 = vmatprep.subr.mxu0 0.0
        %978 = vmatpush1.msra.mxu0 0.0
        %979 = vmatprep.subr.mxu0 0.0
        %980 = vmatpush1.msra.mxu0 0.0
        %981 = vmatprep.subr.mxu0 0.0
        %982 = vmatpush1.msra.mxu0 0.0
        %983 = vmatprep.subr.mxu0 0.0
        %984 = vmatpush1.msra.mxu0 0.0
        %985 = vmatprep.subr.mxu0 0.0
        %986 = vmatpush1.msra.mxu0 0.0
        %987 = vmatprep.subr.mxu0 0.0
        %988 = vmatpush1.msra.mxu0 0.0
        %989 = vmatprep.subr.mxu0 0.0
        %990 = vmatpush1.msra.mxu0 0.0
        %991 = vmatprep.subr.mxu0 0.0
        %992 = vmatpush1.msra.mxu0 0.0
        %993 = vmatprep.subr.mxu0 0.0
        %994 = vmatpush1.msra.mxu0 0.0
        %995 = vmatprep.subr.mxu0 0.0
        %996 = vmatpush1.msra.mxu0 0.0
        %997 = vmatprep.subr.mxu0 0.0
        %998 = vmatpush1.msra.mxu0 0.0
        %999 = vmatprep.subr.mxu0 0.0
        %1000 = vmatpush1.msra.mxu0 0.0
        %1001 = vmatprep.subr.mxu0 0.0
        %1002 = vmatpush1.msra.mxu0 0.0
        %1003 = vmatprep.subr.mxu0 0.0
        %1004 = vmatpush1.msra.mxu0 0.0
        %1005 = vmatprep.subr.mxu0 0.0
        %1006 = vmatpush1.msra.mxu0 0.0
        %1007 = vmatprep.subr.mxu0 0.0
        %1008 = vmatpush1.msra.mxu0 0.0
        %1009 = vmatprep.subr.mxu0 0.0
        %1010 = vmatpush1.msra.mxu0 0.0
        %1011 = vmatprep.subr.mxu0 0.0
        %1012 = vmatpush1.msra.mxu0 0.0
        %1013 = vmatprep.subr.mxu0 0.0
        %1014 = vmatpush1.msra.mxu0 0.0
        %1015 = vmatprep.subr.mxu0 0.0
        %1016 = vmatpush1.msra.mxu0 0.0
        %1017 = vmatprep.subr.mxu0 0.0
        %1018 = vmatpush1.msra.mxu0 0.0
        %1019 = vmatprep.subr.mxu0 0.0
        %1020 = vmatpush1.msra.mxu0 0.0
        %1021 = vmatprep.subr.mxu0 0.0
        %1022 = vmatpush1.msra.mxu0 0.0
        %1023 = vmatprep.subr.mxu0 0.0
        %1024 = vmatpush1.msra.mxu0 0.0
        %1025 = vmatprep.subr.mxu0 0.0
        %1026 = vmatpush1.msra.mxu0 0.0
        %1027 = vmatprep.subr.mxu0 0.0
        %1028 = vmatpush1.msra.mxu0 0.0
        %1029 = vmatprep.subr.mxu0 0.0
        %1030 = vmatpush1.msra.mxu0 0.0
        %1031 = vmatprep.subr.mxu0 0.0
        %1032 = vmatpush1.msra.mxu0 0.0
        %1033 = vmatprep.mubr.f32.mxu0 0.0
        %1034 = vmatmul.mubr.f32.gmra.mrb[0].mxu0 %v967
        %v1035 = vpop.f32.mrb[0].mxu0
        %v1036 = vadd.f32 0.0, %v1035
        %v1037 = vpop.f32.mrb[0].mxu0
        %1038 = vdwg.mxu0
        %1039 = vrot.lane.b32.xlu0 %v725, 127
        %v1040 = vpop.permute.xlu0 %1039
        %v1043 = vsel %vm733, %v959, 0
        %1045 = vmatprep.subr.mxu0 0.0
        %1046 = vmatpush1.msra.mxu0 %v1040
        %1047 = vmatprep.subr.mxu0 0.0
        %1048 = vmatpush1.msra.mxu0 0.0
        %1049 = vmatprep.subr.mxu0 0.0
        %1050 = vmatpush1.msra.mxu0 0.0
        %1051 = vmatprep.subr.mxu0 0.0
        %1052 = vmatpush1.msra.mxu0 0.0
        %1053 = vmatprep.subr.mxu0 0.0
        %1054 = vmatpush1.msra.mxu0 0.0
        %1055 = vmatprep.subr.mxu0 0.0
        %1056 = vmatpush1.msra.mxu0 0.0
        %1057 = vmatprep.subr.mxu0 0.0
        %1058 = vmatpush1.msra.mxu0 0.0
        %1059 = vmatprep.subr.mxu0 0.0
        %1060 = vmatpush1.msra.mxu0 0.0
        %1061 = vmatprep.subr.mxu0 0.0
        %1062 = vmatpush1.msra.mxu0 0.0
        %1063 = vmatprep.subr.mxu0 0.0
        %1064 = vmatpush1.msra.mxu0 0.0
        %1065 = vmatprep.subr.mxu0 0.0
        %1066 = vmatpush1.msra.mxu0 0.0
        %1067 = vmatprep.subr.mxu0 0.0
        %1068 = vmatpush1.msra.mxu0 0.0
        %1069 = vmatprep.subr.mxu0 0.0
        %1070 = vmatpush1.msra.mxu0 0.0
        %1071 = vmatprep.subr.mxu0 0.0
        %1072 = vmatpush1.msra.mxu0 0.0
        %1073 = vmatprep.subr.mxu0 0.0
        %1074 = vmatpush1.msra.mxu0 0.0
        %1075 = vmatprep.subr.mxu0 0.0
        %1076 = vmatpush1.msra.mxu0 0.0
        %1077 = vmatprep.subr.mxu0 0.0
        %1078 = vmatpush1.msra.mxu0 0.0
        %1079 = vmatprep.subr.mxu0 0.0
        %1080 = vmatpush1.msra.mxu0 0.0
        %1081 = vmatprep.subr.mxu0 0.0
        %1082 = vmatpush1.msra.mxu0 0.0
        %1083 = vmatprep.subr.mxu0 0.0
        %1084 = vmatpush1.msra.mxu0 0.0
        %1085 = vmatprep.subr.mxu0 0.0
        %1086 = vmatpush1.msra.mxu0 0.0
        %1087 = vmatprep.subr.mxu0 0.0
        %1088 = vmatpush1.msra.mxu0 0.0
        %1089 = vmatprep.subr.mxu0 0.0
        %1090 = vmatpush1.msra.mxu0 0.0
        %1091 = vmatprep.subr.mxu0 0.0
        %1092 = vmatpush1.msra.mxu0 0.0
        %1093 = vmatprep.subr.mxu0 0.0
        %1094 = vmatpush1.msra.mxu0 0.0
        %1095 = vmatprep.subr.mxu0 0.0
        %1096 = vmatpush1.msra.mxu0 0.0
        %1097 = vmatprep.subr.mxu0 0.0
        %1098 = vmatpush1.msra.mxu0 0.0
        %1099 = vmatprep.subr.mxu0 0.0
        %1100 = vmatpush1.msra.mxu0 0.0
        %1101 = vmatprep.subr.mxu0 0.0
        %1102 = vmatpush1.msra.mxu0 0.0
        %1103 = vmatprep.subr.mxu0 0.0
        %1104 = vmatpush1.msra.mxu0 0.0
        %1105 = vmatprep.subr.mxu0 0.0
        %1106 = vmatpush1.msra.mxu0 0.0
        %1107 = vmatprep.subr.mxu0 0.0
        %1108 = vmatpush1.msra.mxu0 0.0
        %1109 = vmatprep.mubr.f32.mxu0 0.0
        %1110 = vmatmul.mubr.f32.gmra.mrb[0].mxu0 %v1043
        %v1111 = vpop.f32.mrb[0].mxu0
        %v1112 = vadd.f32 %v1036, %v1111
        %v1113 = vpop.f32.mrb[0].mxu0
        %1114 = vdwg.mxu0
        %s1115 = scalar_lea.vmem %s6, 16
        %v1116 = vld [vmem:[%s1115] sm:$0xff]
        %1117 = vrot.lane.b32.xlu0 %v725, 125
        %v1118 = vpop.permute.xlu0 %1117
        %v1121 = vsel %vm733, %v1116, 0
        %1123 = vmatprep.subr.mxu0 0.0
        %1124 = vmatpush1.msra.mxu0 %v1118
        %1125 = vmatprep.subr.mxu0 0.0
        %1126 = vmatpush1.msra.mxu0 0.0
        %1127 = vmatprep.subr.mxu0 0.0
        %1128 = vmatpush1.msra.mxu0 0.0
        %1129 = vmatprep.subr.mxu0 0.0
        %1130 = vmatpush1.msra.mxu0 0.0
        %1131 = vmatprep.subr.mxu0 0.0
        %1132 = vmatpush1.msra.mxu0 0.0
        %1133 = vmatprep.subr.mxu0 0.0
        %1134 = vmatpush1.msra.mxu0 0.0
        %1135 = vmatprep.subr.mxu0 0.0
        %1136 = vmatpush1.msra.mxu0 0.0
        %1137 = vmatprep.subr.mxu0 0.0
        %1138 = vmatpush1.msra.mxu0 0.0
        %1139 = vmatprep.subr.mxu0 0.0
        %1140 = vmatpush1.msra.mxu0 0.0
        %1141 = vmatprep.subr.mxu0 0.0
        %1142 = vmatpush1.msra.mxu0 0.0
        %1143 = vmatprep.subr.mxu0 0.0
        %1144 = vmatpush1.msra.mxu0 0.0
        %1145 = vmatprep.subr.mxu0 0.0
        %1146 = vmatpush1.msra.mxu0 0.0
        %1147 = vmatprep.subr.mxu0 0.0
        %1148 = vmatpush1.msra.mxu0 0.0
        %1149 = vmatprep.subr.mxu0 0.0
        %1150 = vmatpush1.msra.mxu0 0.0
        %1151 = vmatprep.subr.mxu0 0.0
        %1152 = vmatpush1.msra.mxu0 0.0
        %1153 = vmatprep.subr.mxu0 0.0
        %1154 = vmatpush1.msra.mxu0 0.0
        %1155 = vmatprep.subr.mxu0 0.0
        %1156 = vmatpush1.msra.mxu0 0.0
        %1157 = vmatprep.subr.mxu0 0.0
        %1158 = vmatpush1.msra.mxu0 0.0
        %1159 = vmatprep.subr.mxu0 0.0
        %1160 = vmatpush1.msra.mxu0 0.0
        %1161 = vmatprep.subr.mxu0 0.0
        %1162 = vmatpush1.msra.mxu0 0.0
        %1163 = vmatprep.subr.mxu0 0.0
        %1164 = vmatpush1.msra.mxu0 0.0
        %1165 = vmatprep.subr.mxu0 0.0
        %1166 = vmatpush1.msra.mxu0 0.0
        %1167 = vmatprep.subr.mxu0 0.0
        %1168 = vmatpush1.msra.mxu0 0.0
        %1169 = vmatprep.subr.mxu0 0.0
        %1170 = vmatpush1.msra.mxu0 0.0
        %1171 = vmatprep.subr.mxu0 0.0
        %1172 = vmatpush1.msra.mxu0 0.0
        %1173 = vmatprep.subr.mxu0 0.0
        %1174 = vmatpush1.msra.mxu0 0.0
        %1175 = vmatprep.subr.mxu0 0.0
        %1176 = vmatpush1.msra.mxu0 0.0
        %1177 = vmatprep.subr.mxu0 0.0
        %1178 = vmatpush1.msra.mxu0 0.0
        %1179 = vmatprep.subr.mxu0 0.0
        %1180 = vmatpush1.msra.mxu0 0.0
        %1181 = vmatprep.subr.mxu0 0.0
        %1182 = vmatpush1.msra.mxu0 0.0
        %1183 = vmatprep.subr.mxu0 0.0
        %1184 = vmatpush1.msra.mxu0 0.0
        %1185 = vmatprep.subr.mxu0 0.0
        %1186 = vmatpush1.msra.mxu0 0.0
        %1187 = vmatprep.mubr.f32.mxu0 0.0
        %1188 = vmatmul.mubr.f32.gmra.mrb[0].mxu0 %v1121
        %v1189 = vpop.f32.mrb[0].mxu0
        %v1190 = vadd.f32 0.0, %v1189
        %v1191 = vpop.f32.mrb[0].mxu0
        %1192 = vdwg.mxu0
        %v1193 = vadd.f32 %v1112, %v1190
        %v1194 = vadd.f32 %v958, %v1193
        %v1195 = vld [vmem:[%s7] sm:$0xff]
        %1197 = vset.pattern.permute.xlu0 0
        %1198 = vperm.xlu0 %1197, %v1195
        %v1199 = vpop.permute.xlu0 %1198
        %v1201 = vadd.f32 %v1194, %v1199
        %v1202 = vld [vmem:[%s8] sm:$0xff]
        %s1203 = scalar_lea.vmem %s8, 8
        %v1204 = vld [vmem:[%s1203] sm:$0xff]
        %1206 = vrot.lane.b32.xlu0 %v1201, 127
        %v1207 = vpop.permute.xlu0 %1206
        %v1210 = vsel %vm733, %v1204, 0
        %1212 = vmatprep.subr.mxu0 0.0
        %1213 = vmatpush1.msra.mxu0 %v1207
        %1214 = vmatprep.subr.mxu0 0.0
        %1215 = vmatpush1.msra.mxu0 0.0
        %1216 = vmatprep.subr.mxu0 0.0
        %1217 = vmatpush1.msra.mxu0 0.0
        %1218 = vmatprep.subr.mxu0 0.0
        %1219 = vmatpush1.msra.mxu0 0.0
        %1220 = vmatprep.subr.mxu0 0.0
        %1221 = vmatpush1.msra.mxu0 0.0
        %1222 = vmatprep.subr.mxu0 0.0
        %1223 = vmatpush1.msra.mxu0 0.0
        %1224 = vmatprep.subr.mxu0 0.0
        %1225 = vmatpush1.msra.mxu0 0.0
        %1226 = vmatprep.subr.mxu0 0.0
        %1227 = vmatpush1.msra.mxu0 0.0
        %1228 = vmatprep.subr.mxu0 0.0
        %1229 = vmatpush1.msra.mxu0 0.0
        %1230 = vmatprep.subr.mxu0 0.0
        %1231 = vmatpush1.msra.mxu0 0.0
        %1232 = vmatprep.subr.mxu0 0.0
        %1233 = vmatpush1.msra.mxu0 0.0
        %1234 = vmatprep.subr.mxu0 0.0
        %1235 = vmatpush1.msra.mxu0 0.0
        %1236 = vmatprep.subr.mxu0 0.0
        %1237 = vmatpush1.msra.mxu0 0.0
        %1238 = vmatprep.subr.mxu0 0.0
        %1239 = vmatpush1.msra.mxu0 0.0
        %1240 = vmatprep.subr.mxu0 0.0
        %1241 = vmatpush1.msra.mxu0 0.0
        %1242 = vmatprep.subr.mxu0 0.0
        %1243 = vmatpush1.msra.mxu0 0.0
        %1244 = vmatprep.subr.mxu0 0.0
        %1245 = vmatpush1.msra.mxu0 0.0
        %1246 = vmatprep.subr.mxu0 0.0
        %1247 = vmatpush1.msra.mxu0 0.0
        %1248 = vmatprep.subr.mxu0 0.0
        %1249 = vmatpush1.msra.mxu0 0.0
        %1250 = vmatprep.subr.mxu0 0.0
        %1251 = vmatpush1.msra.mxu0 0.0
        %1252 = vmatprep.subr.mxu0 0.0
        %1253 = vmatpush1.msra.mxu0 0.0
        %1254 = vmatprep.subr.mxu0 0.0
        %1255 = vmatpush1.msra.mxu0 0.0
        %1256 = vmatprep.subr.mxu0 0.0
        %1257 = vmatpush1.msra.mxu0 0.0
        %1258 = vmatprep.subr.mxu0 0.0
        %1259 = vmatpush1.msra.mxu0 0.0
        %1260 = vmatprep.subr.mxu0 0.0
        %1261 = vmatpush1.msra.mxu0 0.0
        %1262 = vmatprep.subr.mxu0 0.0
        %1263 = vmatpush1.msra.mxu0 0.0
        %1264 = vmatprep.subr.mxu0 0.0
        %1265 = vmatpush1.msra.mxu0 0.0
        %1266 = vmatprep.subr.mxu0 0.0
        %1267 = vmatpush1.msra.mxu0 0.0
        %1268 = vmatprep.subr.mxu0 0.0
        %1269 = vmatpush1.msra.mxu0 0.0
        %1270 = vmatprep.subr.mxu0 0.0
        %1271 = vmatpush1.msra.mxu0 0.0
        %1272 = vmatprep.subr.mxu0 0.0
        %1273 = vmatpush1.msra.mxu0 0.0
        %1274 = vmatprep.subr.mxu0 0.0
        %1275 = vmatpush1.msra.mxu0 0.0
        %1276 = vmatprep.mubr.f32.mxu0 0.0
        %1277 = vmatmul.mubr.f32.gmra.mrb[0].mxu0 %v1210
        %v1278 = vpop.f32.mrb[0].mxu0
        %v1279 = vadd.f32 0.0, %v1278
        %v1280 = vpop.f32.mrb[0].mxu0
        %1281 = vdwg.mxu0
        %v1283 = vsel %vm733, %v1202, 0
        %1285 = vmatprep.subr.mxu0 0.0
        %1286 = vmatpush1.msra.mxu0 %v1201
        %1287 = vmatprep.subr.mxu0 0.0
        %1288 = vmatpush1.msra.mxu0 0.0
        %1289 = vmatprep.subr.mxu0 0.0
        %1290 = vmatpush1.msra.mxu0 0.0
        %1291 = vmatprep.subr.mxu0 0.0
        %1292 = vmatpush1.msra.mxu0 0.0
        %1293 = vmatprep.subr.mxu0 0.0
        %1294 = vmatpush1.msra.mxu0 0.0
        %1295 = vmatprep.subr.mxu0 0.0
        %1296 = vmatpush1.msra.mxu0 0.0
        %1297 = vmatprep.subr.mxu0 0.0
        %1298 = vmatpush1.msra.mxu0 0.0
        %1299 = vmatprep.subr.mxu0 0.0
        %1300 = vmatpush1.msra.mxu0 0.0
        %1301 = vmatprep.subr.mxu0 0.0
        %1302 = vmatpush1.msra.mxu0 0.0
        %1303 = vmatprep.subr.mxu0 0.0
        %1304 = vmatpush1.msra.mxu0 0.0
        %1305 = vmatprep.subr.mxu0 0.0
        %1306 = vmatpush1.msra.mxu0 0.0
        %1307 = vmatprep.subr.mxu0 0.0
        %1308 = vmatpush1.msra.mxu0 0.0
        %1309 = vmatprep.subr.mxu0 0.0
        %1310 = vmatpush1.msra.mxu0 0.0
        %1311 = vmatprep.subr.mxu0 0.0
        %1312 = vmatpush1.msra.mxu0 0.0
        %1313 = vmatprep.subr.mxu0 0.0
        %1314 = vmatpush1.msra.mxu0 0.0
        %1315 = vmatprep.subr.mxu0 0.0
        %1316 = vmatpush1.msra.mxu0 0.0
        %1317 = vmatprep.subr.mxu0 0.0
        %1318 = vmatpush1.msra.mxu0 0.0
        %1319 = vmatprep.subr.mxu0 0.0
        %1320 = vmatpush1.msra.mxu0 0.0
        %1321 = vmatprep.subr.mxu0 0.0
        %1322 = vmatpush1.msra.mxu0 0.0
        %1323 = vmatprep.subr.mxu0 0.0
        %1324 = vmatpush1.msra.mxu0 0.0
        %1325 = vmatprep.subr.mxu0 0.0
        %1326 = vmatpush1.msra.mxu0 0.0
        %1327 = vmatprep.subr.mxu0 0.0
        %1328 = vmatpush1.msra.mxu0 0.0
        %1329 = vmatprep.subr.mxu0 0.0
        %1330 = vmatpush1.msra.mxu0 0.0
        %1331 = vmatprep.subr.mxu0 0.0
        %1332 = vmatpush1.msra.mxu0 0.0
        %1333 = vmatprep.subr.mxu0 0.0
        %1334 = vmatpush1.msra.mxu0 0.0
        %1335 = vmatprep.subr.mxu0 0.0
        %1336 = vmatpush1.msra.mxu0 0.0
        %1337 = vmatprep.subr.mxu0 0.0
        %1338 = vmatpush1.msra.mxu0 0.0
        %1339 = vmatprep.subr.mxu0 0.0
        %1340 = vmatpush1.msra.mxu0 0.0
        %1341 = vmatprep.subr.mxu0 0.0
        %1342 = vmatpush1.msra.mxu0 0.0
        %1343 = vmatprep.subr.mxu0 0.0
        %1344 = vmatpush1.msra.mxu0 0.0
        %1345 = vmatprep.subr.mxu0 0.0
        %1346 = vmatpush1.msra.mxu0 0.0
        %1347 = vmatprep.subr.mxu0 0.0
        %1348 = vmatpush1.msra.mxu0 0.0
        %1349 = vmatprep.mubr.f32.mxu0 0.0
        %1350 = vmatmul.mubr.f32.gmra.mrb[0].mxu0 %v1283
        %v1351 = vpop.f32.mrb[0].mxu0
        %v1352 = vadd.f32 %v1279, %v1351
        %v1353 = vpop.f32.mrb[0].mxu0
        %1354 = vdwg.mxu0
        %s1355 = scalar_lea.vmem %s8, 16
        %v1356 = vld [vmem:[%s1355] sm:$0xff]
        %1357 = vrot.lane.b32.xlu0 %v1201, 126
        %v1358 = vpop.permute.xlu0 %1357
        %v1361 = vsel %vm733, %v1356, 0
        %1363 = vmatprep.subr.mxu0 0.0
        %1364 = vmatpush1.msra.mxu0 %v1358
        %1365 = vmatprep.subr.mxu0 0.0
        %1366 = vmatpush1.msra.mxu0 0.0
        %1367 = vmatprep.subr.mxu0 0.0
        %1368 = vmatpush1.msra.mxu0 0.0
        %1369 = vmatprep.subr.mxu0 0.0
        %1370 = vmatpush1.msra.mxu0 0.0
        %1371 = vmatprep.subr.mxu0 0.0
        %1372 = vmatpush1.msra.mxu0 0.0
        %1373 = vmatprep.subr.mxu0 0.0
        %1374 = vmatpush1.msra.mxu0 0.0
        %1375 = vmatprep.subr.mxu0 0.0
        %1376 = vmatpush1.msra.mxu0 0.0
        %1377 = vmatprep.subr.mxu0 0.0
        %1378 = vmatpush1.msra.mxu0 0.0
        %1379 = vmatprep.subr.mxu0 0.0
        %1380 = vmatpush1.msra.mxu0 0.0
        %1381 = vmatprep.subr.mxu0 0.0
        %1382 = vmatpush1.msra.mxu0 0.0
        %1383 = vmatprep.subr.mxu0 0.0
        %1384 = vmatpush1.msra.mxu0 0.0
        %1385 = vmatprep.subr.mxu0 0.0
        %1386 = vmatpush1.msra.mxu0 0.0
        %1387 = vmatprep.subr.mxu0 0.0
        %1388 = vmatpush1.msra.mxu0 0.0
        %1389 = vmatprep.subr.mxu0 0.0
        %1390 = vmatpush1.msra.mxu0 0.0
        %1391 = vmatprep.subr.mxu0 0.0
        %1392 = vmatpush1.msra.mxu0 0.0
        %1393 = vmatprep.subr.mxu0 0.0
        %1394 = vmatpush1.msra.mxu0 0.0
        %1395 = vmatprep.subr.mxu0 0.0
        %1396 = vmatpush1.msra.mxu0 0.0
        %1397 = vmatprep.subr.mxu0 0.0
        %1398 = vmatpush1.msra.mxu0 0.0
        %1399 = vmatprep.subr.mxu0 0.0
        %1400 = vmatpush1.msra.mxu0 0.0
        %1401 = vmatprep.subr.mxu0 0.0
        %1402 = vmatpush1.msra.mxu0 0.0
        %1403 = vmatprep.subr.mxu0 0.0
        %1404 = vmatpush1.msra.mxu0 0.0
        %1405 = vmatprep.subr.mxu0 0.0
        %1406 = vmatpush1.msra.mxu0 0.0
        %1407 = vmatprep.subr.mxu0 0.0
        %1408 = vmatpush1.msra.mxu0 0.0
        %1409 = vmatprep.subr.mxu0 0.0
        %1410 = vmatpush1.msra.mxu0 0.0
        %1411 = vmatprep.subr.mxu0 0.0
        %1412 = vmatpush1.msra.mxu0 0.0
        %1413 = vmatprep.subr.mxu0 0.0
        %1414 = vmatpush1.msra.mxu0 0.0
        %1415 = vmatprep.subr.mxu0 0.0
        %1416 = vmatpush1.msra.mxu0 0.0
        %1417 = vmatprep.subr.mxu0 0.0
        %1418 = vmatpush1.msra.mxu0 0.0
        %1419 = vmatprep.subr.mxu0 0.0
        %1420 = vmatpush1.msra.mxu0 0.0
        %1421 = vmatprep.subr.mxu0 0.0
        %1422 = vmatpush1.msra.mxu0 0.0
        %1423 = vmatprep.subr.mxu0 0.0
        %1424 = vmatpush1.msra.mxu0 0.0
        %1425 = vmatprep.subr.mxu0 0.0
        %1426 = vmatpush1.msra.mxu0 0.0
        %1427 = vmatprep.mubr.f32.mxu0 0.0
        %1428 = vmatmul.mubr.f32.gmra.mrb[0].mxu0 %v1361
        %v1429 = vpop.f32.mrb[0].mxu0
        %v1430 = vadd.f32 0.0, %v1429
        %v1431 = vpop.f32.mrb[0].mxu0
        %1432 = vdwg.mxu0
        %v1433 = vadd.f32 %v1352, %v1430
        %v1434 = vld [vmem:[%s9] sm:$0xff]
        %1436 = vset.pattern.permute.xlu0 0
        %1437 = vperm.xlu0 %1436, %v1434
        %v1438 = vpop.permute.xlu0 %1437
        %v1440 = vadd.f32 %v1433, %v1438
        %vm1441 = vcmp.ge.f32.partialorder %v1440, 0.0
        %v1442 = vmul.f32 %v1440, 0.01
        %v1443 = vsel %vm1441, %v1440, %v1442
        %v1444 = vld [vmem:[%s10] sm:$0xff]
        %s1445 = scalar_lea.vmem %s10, 8
        %v1446 = vld [vmem:[%s1445] sm:$0xff]
        %1448 = vrot.lane.b32.xlu0 %v1443, 127
        %v1449 = vpop.permute.xlu0 %1448
        %v1452 = vsel %vm733, %v1446, 0
        %1454 = vmatprep.subr.mxu0 0.0
        %1455 = vmatpush1.msra.mxu0 %v1449
        %1456 = vmatprep.subr.mxu0 0.0
        %1457 = vmatpush1.msra.mxu0 0.0
        %1458 = vmatprep.subr.mxu0 0.0
        %1459 = vmatpush1.msra.mxu0 0.0
        %1460 = vmatprep.subr.mxu0 0.0
        %1461 = vmatpush1.msra.mxu0 0.0
        %1462 = vmatprep.subr.mxu0 0.0
        %1463 = vmatpush1.msra.mxu0 0.0
        %1464 = vmatprep.subr.mxu0 0.0
        %1465 = vmatpush1.msra.mxu0 0.0
        %1466 = vmatprep.subr.mxu0 0.0
        %1467 = vmatpush1.msra.mxu0 0.0
        %1468 = vmatprep.subr.mxu0 0.0
        %1469 = vmatpush1.msra.mxu0 0.0
        %1470 = vmatprep.subr.mxu0 0.0
        %1471 = vmatpush1.msra.mxu0 0.0
        %1472 = vmatprep.subr.mxu0 0.0
        %1473 = vmatpush1.msra.mxu0 0.0
        %1474 = vmatprep.subr.mxu0 0.0
        %1475 = vmatpush1.msra.mxu0 0.0
        %1476 = vmatprep.subr.mxu0 0.0
        %1477 = vmatpush1.msra.mxu0 0.0
        %1478 = vmatprep.subr.mxu0 0.0
        %1479 = vmatpush1.msra.mxu0 0.0
        %1480 = vmatprep.subr.mxu0 0.0
        %1481 = vmatpush1.msra.mxu0 0.0
        %1482 = vmatprep.subr.mxu0 0.0
        %1483 = vmatpush1.msra.mxu0 0.0
        %1484 = vmatprep.subr.mxu0 0.0
        %1485 = vmatpush1.msra.mxu0 0.0
        %1486 = vmatprep.subr.mxu0 0.0
        %1487 = vmatpush1.msra.mxu0 0.0
        %1488 = vmatprep.subr.mxu0 0.0
        %1489 = vmatpush1.msra.mxu0 0.0
        %1490 = vmatprep.subr.mxu0 0.0
        %1491 = vmatpush1.msra.mxu0 0.0
        %1492 = vmatprep.subr.mxu0 0.0
        %1493 = vmatpush1.msra.mxu0 0.0
        %1494 = vmatprep.subr.mxu0 0.0
        %1495 = vmatpush1.msra.mxu0 0.0
        %1496 = vmatprep.subr.mxu0 0.0
        %1497 = vmatpush1.msra.mxu0 0.0
        %1498 = vmatprep.subr.mxu0 0.0
        %1499 = vmatpush1.msra.mxu0 0.0
        %1500 = vmatprep.subr.mxu0 0.0
        %1501 = vmatpush1.msra.mxu0 0.0
        %1502 = vmatprep.subr.mxu0 0.0
        %1503 = vmatpush1.msra.mxu0 0.0
        %1504 = vmatprep.subr.mxu0 0.0
        %1505 = vmatpush1.msra.mxu0 0.0
        %1506 = vmatprep.subr.mxu0 0.0
        %1507 = vmatpush1.msra.mxu0 0.0
        %1508 = vmatprep.subr.mxu0 0.0
        %1509 = vmatpush1.msra.mxu0 0.0
        %1510 = vmatprep.subr.mxu0 0.0
        %1511 = vmatpush1.msra.mxu0 0.0
        %1512 = vmatprep.subr.mxu0 0.0
        %1513 = vmatpush1.msra.mxu0 0.0
        %1514 = vmatprep.subr.mxu0 0.0
        %1515 = vmatpush1.msra.mxu0 0.0
        %1516 = vmatprep.subr.mxu0 0.0
        %1517 = vmatpush1.msra.mxu0 0.0
        %1518 = vmatprep.mubr.f32.mxu0 0.0
        %1519 = vmatmul.mubr.f32.gmra.mrb[0].mxu0 %v1452
        %v1520 = vpop.f32.mrb[0].mxu0
        %v1521 = vadd.f32 0.0, %v1520
        %v1522 = vpop.f32.mrb[0].mxu0
        %1523 = vdwg.mxu0
        %v1525 = vsel %vm733, %v1444, 0
        %1527 = vmatprep.subr.mxu0 0.0
        %1528 = vmatpush1.msra.mxu0 %v1443
        %1529 = vmatprep.subr.mxu0 0.0
        %1530 = vmatpush1.msra.mxu0 0.0
        %1531 = vmatprep.subr.mxu0 0.0
        %1532 = vmatpush1.msra.mxu0 0.0
        %1533 = vmatprep.subr.mxu0 0.0
        %1534 = vmatpush1.msra.mxu0 0.0
        %1535 = vmatprep.subr.mxu0 0.0
        %1536 = vmatpush1.msra.mxu0 0.0
        %1537 = vmatprep.subr.mxu0 0.0
        %1538 = vmatpush1.msra.mxu0 0.0
        %1539 = vmatprep.subr.mxu0 0.0
        %1540 = vmatpush1.msra.mxu0 0.0
        %1541 = vmatprep.subr.mxu0 0.0
        %1542 = vmatpush1.msra.mxu0 0.0
        %1543 = vmatprep.subr.mxu0 0.0
        %1544 = vmatpush1.msra.mxu0 0.0
        %1545 = vmatprep.subr.mxu0 0.0
        %1546 = vmatpush1.msra.mxu0 0.0
        %1547 = vmatprep.subr.mxu0 0.0
        %1548 = vmatpush1.msra.mxu0 0.0
        %1549 = vmatprep.subr.mxu0 0.0
        %1550 = vmatpush1.msra.mxu0 0.0
        %1551 = vmatprep.subr.mxu0 0.0
        %1552 = vmatpush1.msra.mxu0 0.0
        %1553 = vmatprep.subr.mxu0 0.0
        %1554 = vmatpush1.msra.mxu0 0.0
        %1555 = vmatprep.subr.mxu0 0.0
        %1556 = vmatpush1.msra.mxu0 0.0
        %1557 = vmatprep.subr.mxu0 0.0
        %1558 = vmatpush1.msra.mxu0 0.0
        %1559 = vmatprep.subr.mxu0 0.0
        %1560 = vmatpush1.msra.mxu0 0.0
        %1561 = vmatprep.subr.mxu0 0.0
        %1562 = vmatpush1.msra.mxu0 0.0
        %1563 = vmatprep.subr.mxu0 0.0
        %1564 = vmatpush1.msra.mxu0 0.0
        %1565 = vmatprep.subr.mxu0 0.0
        %1566 = vmatpush1.msra.mxu0 0.0
        %1567 = vmatprep.subr.mxu0 0.0
        %1568 = vmatpush1.msra.mxu0 0.0
        %1569 = vmatprep.subr.mxu0 0.0
        %1570 = vmatpush1.msra.mxu0 0.0
        %1571 = vmatprep.subr.mxu0 0.0
        %1572 = vmatpush1.msra.mxu0 0.0
        %1573 = vmatprep.subr.mxu0 0.0
        %1574 = vmatpush1.msra.mxu0 0.0
        %1575 = vmatprep.subr.mxu0 0.0
        %1576 = vmatpush1.msra.mxu0 0.0
        %1577 = vmatprep.subr.mxu0 0.0
        %1578 = vmatpush1.msra.mxu0 0.0
        %1579 = vmatprep.subr.mxu0 0.0
        %1580 = vmatpush1.msra.mxu0 0.0
        %1581 = vmatprep.subr.mxu0 0.0
        %1582 = vmatpush1.msra.mxu0 0.0
        %1583 = vmatprep.subr.mxu0 0.0
        %1584 = vmatpush1.msra.mxu0 0.0
        %1585 = vmatprep.subr.mxu0 0.0
        %1586 = vmatpush1.msra.mxu0 0.0
        %1587 = vmatprep.subr.mxu0 0.0
        %1588 = vmatpush1.msra.mxu0 0.0
        %1589 = vmatprep.subr.mxu0 0.0
        %1590 = vmatpush1.msra.mxu0 0.0
        %1591 = vmatprep.mubr.f32.mxu0 0.0
        %1592 = vmatmul.mubr.f32.gmra.mrb[0].mxu0 %v1525
        %v1593 = vpop.f32.mrb[0].mxu0
        %v1594 = vadd.f32 %v1521, %v1593
        %v1595 = vpop.f32.mrb[0].mxu0
        %1596 = vdwg.mxu0
        %s1597 = scalar_lea.vmem %s10, 16
        %v1598 = vld [vmem:[%s1597] sm:$0xff]
        %1599 = vrot.lane.b32.xlu0 %v1443, 126
        %v1600 = vpop.permute.xlu0 %1599
        %v1603 = vsel %vm733, %v1598, 0
        %1605 = vmatprep.subr.mxu0 0.0
        %1606 = vmatpush1.msra.mxu0 %v1600
        %1607 = vmatprep.subr.mxu0 0.0
        %1608 = vmatpush1.msra.mxu0 0.0
        %1609 = vmatprep.subr.mxu0 0.0
        %1610 = vmatpush1.msra.mxu0 0.0
        %1611 = vmatprep.subr.mxu0 0.0
        %1612 = vmatpush1.msra.mxu0 0.0
        %1613 = vmatprep.subr.mxu0 0.0
        %1614 = vmatpush1.msra.mxu0 0.0
        %1615 = vmatprep.subr.mxu0 0.0
        %1616 = vmatpush1.msra.mxu0 0.0
        %1617 = vmatprep.subr.mxu0 0.0
        %1618 = vmatpush1.msra.mxu0 0.0
        %1619 = vmatprep.subr.mxu0 0.0
        %1620 = vmatpush1.msra.mxu0 0.0
        %1621 = vmatprep.subr.mxu0 0.0
        %1622 = vmatpush1.msra.mxu0 0.0
        %1623 = vmatprep.subr.mxu0 0.0
        %1624 = vmatpush1.msra.mxu0 0.0
        %1625 = vmatprep.subr.mxu0 0.0
        %1626 = vmatpush1.msra.mxu0 0.0
        %1627 = vmatprep.subr.mxu0 0.0
        %1628 = vmatpush1.msra.mxu0 0.0
        %1629 = vmatprep.subr.mxu0 0.0
        %1630 = vmatpush1.msra.mxu0 0.0
        %1631 = vmatprep.subr.mxu0 0.0
        %1632 = vmatpush1.msra.mxu0 0.0
        %1633 = vmatprep.subr.mxu0 0.0
        %1634 = vmatpush1.msra.mxu0 0.0
        %1635 = vmatprep.subr.mxu0 0.0
        %1636 = vmatpush1.msra.mxu0 0.0
        %1637 = vmatprep.subr.mxu0 0.0
        %1638 = vmatpush1.msra.mxu0 0.0
        %1639 = vmatprep.subr.mxu0 0.0
        %1640 = vmatpush1.msra.mxu0 0.0
        %1641 = vmatprep.subr.mxu0 0.0
        %1642 = vmatpush1.msra.mxu0 0.0
        %1643 = vmatprep.subr.mxu0 0.0
        %1644 = vmatpush1.msra.mxu0 0.0
        %1645 = vmatprep.subr.mxu0 0.0
        %1646 = vmatpush1.msra.mxu0 0.0
        %1647 = vmatprep.subr.mxu0 0.0
        %1648 = vmatpush1.msra.mxu0 0.0
        %1649 = vmatprep.subr.mxu0 0.0
        %1650 = vmatpush1.msra.mxu0 0.0
        %1651 = vmatprep.subr.mxu0 0.0
        %1652 = vmatpush1.msra.mxu0 0.0
        %1653 = vmatprep.subr.mxu0 0.0
        %1654 = vmatpush1.msra.mxu0 0.0
        %1655 = vmatprep.subr.mxu0 0.0
        %1656 = vmatpush1.msra.mxu0 0.0
        %1657 = vmatprep.subr.mxu0 0.0
        %1658 = vmatpush1.msra.mxu0 0.0
        %1659 = vmatprep.subr.mxu0 0.0
        %1660 = vmatpush1.msra.mxu0 0.0
        %1661 = vmatprep.subr.mxu0 0.0
        %1662 = vmatpush1.msra.mxu0 0.0
        %1663 = vmatprep.subr.mxu0 0.0
        %1664 = vmatpush1.msra.mxu0 0.0
        %1665 = vmatprep.subr.mxu0 0.0
        %1666 = vmatpush1.msra.mxu0 0.0
        %1667 = vmatprep.subr.mxu0 0.0
        %1668 = vmatpush1.msra.mxu0 0.0
        %1669 = vmatprep.mubr.f32.mxu0 0.0
        %1670 = vmatmul.mubr.f32.gmra.mrb[0].mxu0 %v1603
        %v1671 = vpop.f32.mrb[0].mxu0
        %v1672 = vadd.f32 0.0, %v1671
        %v1673 = vpop.f32.mrb[0].mxu0
        %1674 = vdwg.mxu0
        %v1675 = vadd.f32 %v1594, %v1672
        %v1676 = vld [vmem:[%s11] sm:$0xff]
        %1678 = vset.pattern.permute.xlu0 0
        %1679 = vperm.xlu0 %1678, %v1676
        %v1680 = vpop.permute.xlu0 %1679
        %v1682 = vadd.f32 %v1675, %v1680
        %v1683 = vadd.f32 %v1682, %v1358
        %vm1684 = vcmp.ge.f32.partialorder %v1683, 0.0
        %v1685 = vmul.f32 %v1683, 0.01
        %v1686 = vsel %vm1684, %v1683, %v1685
        %vm1687 = vcmask 211968
        %1688 = vst.msk [vmem:[%s479] sm:$0xff] %vm1687, %v1686
        %s1689 = sand.u32 %s302, 1
        %s1690 = scalar_lea.sflag [#allocation4], %s1689
        %s1691 = sand.u32 %s302, 1
        %s1692 = smul.addr %s1691, 8
        %s1693 = scalar_lea.vmem [#allocation8], %s1692
        // Predicated region
        $region81: #{tpu_custom_call.1} parent=67 // pred_check
          %p1694 = pneg %p312
        $region82: #{tpu_custom_call.1} parent=67 // pred_check_branch
          %1696 = sbr.rel (%p1694) target = $region84
        $region83: #{tpu_custom_call.1} parent=67 // pred_region
          %s1698 = ssub.s32 128, 128
          %1699 = vsyncadd %s1690, %s1698
          %s1700 = smul.addr %s32, 128
          %s1701 = scalar_lea.hbm %s12, %s1700
          %s1703 = sshll.u32 %s1693, 4
          %s1704 = int_to_ptr.vmem [resolvable:$true] %s1703
          %1706 = dma.vmem_to_hbm [thread:$0]  %s1704, 128, %s1701, %s1690
        $region84: #{tpu_custom_call.1} parent=67 // pred_fallthru
          _
      $region68: #{tpu_custom_call.1} parent=5 // pred_fallthru
        _
      %p1707 = scmp.le.s32.totalorder 2, %s27
      // Predicated region
      $region85: #{tpu_custom_call.1} parent=5 // pred_check
        %p1708 = pneg %p1707
      $region86: #{tpu_custom_call.1} parent=5 // pred_check_branch
        %1710 = sbr.rel (%p1708) target = $region88
      $region87: #{tpu_custom_call.1} parent=5 // pred_region
        %s1711 = ssub.s32 %s27, 2
        // Predicated region
        $region89: #{tpu_custom_call.1} parent=87 // pred_check
          %p1712 = pneg %p318
        $region90: #{tpu_custom_call.1} parent=87 // pred_check_branch
          %1714 = sbr.rel (%p1712) target = $region92
        $region91: #{tpu_custom_call.1} parent=87 // pred_region
          %s1715 = sand.u32 %s303, 1
          %s1716 = scalar_lea.sflag [#allocation4], %s1715
          %s1717 = sand.u32 %s303, 1
          %s1718 = smul.addr %s1717, 8
          %s1719 = scalar_lea.vmem [#allocation8], %s1718
          %1720 = dma.done %s1716, 128
        $region92: #{tpu_custom_call.1} parent=87 // pred_fallthru
          _
      $region88: #{tpu_custom_call.1} parent=5 // pred_fallthru
        _
    $region6: #{tpu_custom_call.1} parent=1 // loop_footer
      %s31 = sadd.s32 1, %s27
    $region7: #{tpu_custom_call.1} parent=1 // loop_footer_branch
      %26 = sbr.rel target = $region3
    $region8: #{tpu_custom_call.1} parent=1 // loop_exit
      _
    %1721 = vsyncpa [#allocation3], 1
    %s1722 = scalar_lea.sflag [#allocation3], 1
    %1723 = vsyncpa %s1722, 1
    %1724 = vsyncpa [#allocation6], 1
    %s1725 = scalar_lea.sflag [#allocation6], 1
    %1726 = vsyncpa %s1725, 1
    %1727 = vsyncpa [#allocation4], 1
    %s1728 = scalar_lea.sflag [#allocation4], 1
    %1729 = vsyncpa %s1728, 1

</llo_original>
